<compile_context>
chip_gen: v7x
topology: tpu7x:2x2x1
jax: 0.10.0
libtpu: 0.0.40
codegen_flags: <defaults>
</compile_context>

<pallas_src>
import jax
import jax.numpy as jnp
from jax.experimental import pallas as pl
from jax.experimental.pallas import tpu as pltpu


def gnn_kernel(x_ref, w1t_ref, b1_ref, w2t_ref, b2_ref, w3t_ref, b3_ref, o_ref):
    # Natural-layout [nb, nIn] tile -> lane-dense [nIn, nb] compute layout.
    # The transpose lands on the (otherwise idle) XLU, the cast on the VPU.
    xt = jnp.transpose(x_ref[...]).astype(jnp.bfloat16)            # (nIn, nb)

    # Layer 1: ChebConv(K=1) == linear, then ReLU.    [hid, nIn] @ [nIn, nb]
    h = jnp.dot(w1t_ref[...], xt, preferred_element_type=jnp.float32)
    h = jnp.maximum(h + b1_ref[...], 0.0).astype(jnp.bfloat16)     # (hid, nb)

    # Layer 2: linear + ReLU.                         [hid, hid] @ [hid, nb]
    h = jnp.dot(w2t_ref[...], h, preferred_element_type=jnp.float32)
    h = jnp.maximum(h + b2_ref[...], 0.0).astype(jnp.bfloat16)     # (hid, nb)

    # Dropout(p=0.0) is the identity.
    # Layer 3: linear (no activation).                [nOut, hid] @ [hid, nb]
    o = jnp.dot(w3t_ref[...], h, preferred_element_type=jnp.float32)
    o = o + b3_ref[...]                                            # (nOut, nb)

    # Emit natural [nb, nOut] output blocks so no post-kernel transpose pass
    # is needed (nOut=8 makes these stores lane-narrow, but that cost is far
    # below the removed extra HBM pass).
    o_ref[...] = jnp.transpose(o).astype(o_ref.dtype)


def _round_up(v, m):
    return ((v + m - 1) // m) * m


def gnn_forward(x, params, *, node_block=4096):
    """x: [N, nInputs] float32. params: dict of W1,b1,W2,b2,W3,b3 (float32).

    Returns [N, nOutputs] float32 (same layout/semantics as the PyTorch module).
    """
    N, nIn = x.shape
    hid = params["W1"].shape[1]
    nOut = params["W3"].shape[1]

    # --- Node-tile selection -------------------------------------------------
    tile = 256  # lane granularity: multiple of 128 (v5e) and 256 (v6e/v7x MXU)
    nb = min(node_block, _round_up(N, tile))       # don't over-pad tiny graphs
    nb = max(tile, (nb // tile) * tile)             # multiple of 256
    if N > 2 * tile:
        # Ensure >= 2 grid steps so the "parallel" axis can be sharded across
        # both v7x TensorCores.
        nb = min(nb, _round_up(pl.cdiv(N, 2), tile))
    grid = (pl.cdiv(N, nb),)

    # --- Weights: tiny, pre-transposed + cast once (negligible traffic) ------
    w1t = params["W1"].T.astype(jnp.bfloat16)    # [hid, nIn]
    w2t = params["W2"].T.astype(jnp.bfloat16)    # [hid, hid]
    w3t = params["W3"].T.astype(jnp.bfloat16)    # [nOut, hid]
    b1 = params["b1"].reshape(hid, 1).astype(jnp.float32)
    b2 = params["b2"].reshape(hid, 1).astype(jnp.float32)
    b3 = params["b3"].reshape(nOut, 1).astype(jnp.float32)

    in_specs = [
        pl.BlockSpec((nb, nIn), lambda i: (i, 0)),    # x tile, natural layout
        pl.BlockSpec((hid, nIn), lambda i: (0, 0)),   # W1^T (VMEM-resident)
        pl.BlockSpec((hid, 1), lambda i: (0, 0)),     # b1
        pl.BlockSpec((hid, hid), lambda i: (0, 0)),   # W2^T
        pl.BlockSpec((hid, 1), lambda i: (0, 0)),     # b2
        pl.BlockSpec((nOut, hid), lambda i: (0, 0)),  # W3^T
        pl.BlockSpec((nOut, 1), lambda i: (0, 0)),    # b3
    ]
    out_spec = pl.BlockSpec((nb, nOut), lambda i: (i, 0))

    n_proc = grid[0] * nb  # nodes actually processed (incl. boundary padding)
    weight_bytes = 2 * (nIn * hid + hid * hid + hid * nOut) + 4 * (2 * hid + nOut)
    cost = pl.CostEstimate(
        flops=2 * n_proc * (nIn * hid + hid * hid + hid * nOut),
        transcendentals=0,
        bytes_accessed=n_proc * 4 * (nIn + nOut) + weight_bytes,
    )

    out = pl.pallas_call(
        gnn_kernel,
        out_shape=jax.ShapeDtypeStruct((N, nOut), jnp.float32),
        grid_spec=pl.GridSpec(
            grid=grid,
            in_specs=in_specs,
            out_specs=out_spec,
        ),
        compiler_params=pltpu.CompilerParams(
            dimension_semantics=("parallel",),
            vmem_limit_bytes=32 * 1024 * 1024,
        ),
        cost_estimate=cost,
    )(x, w1t, b1, w2t, b2, w3t, b3)

    return out


def init_params(key, n_inputs, n_outputs, hid):
    """Deterministic synthetic init (glorot weights; small random biases so the
    bias-add path is exercised numerically — PyG ChebConv inits bias to 0)."""
    k1, k2, k3, k4, k5, k6 = jax.random.split(key, 6)

    def glorot(k, shape):
        fan_in, fan_out = shape
        limit = jnp.sqrt(6.0 / (fan_in + fan_out))
        return jax.random.uniform(k, shape, jnp.float32, -limit, limit)

    return {
        "W1": glorot(k1, (n_inputs, hid)),
        "b1": 0.1 * jax.random.normal(k4, (1, hid), jnp.float32),
        "W2": glorot(k2, (hid, hid)),
        "b2": 0.1 * jax.random.normal(k5, (1, hid), jnp.float32),
        "W3": glorot(k3, (hid, n_outputs)),
        "b3": 0.1 * jax.random.normal(k6, (1, n_outputs), jnp.float32),
    }


def gnn_reference(x, p):
    """Mirrors the kernel arithmetic (bf16 operands, f32 accumulation)."""
    def lin(h, w, b):
        return jnp.dot(h.astype(jnp.bfloat16), w.astype(jnp.bfloat16),
                       preferred_element_type=jnp.float32) + b
    h = jnp.maximum(lin(x, p["W1"], p["b1"]), 0.0)
    h = jnp.maximum(lin(h, p["W2"], p["b2"]), 0.0)
    return lin(h, p["W3"], p["b3"])


if __name__ == "__main__":
    key = jax.random.PRNGKey(0)
    kx, kp = jax.random.split(key)

    # Small shapes consistent with the module; 640 nodes exercises a 2-step
    # grid plus a ragged (padded) final node block.
    num_nodes = 640
    n_inputs = 16
    n_outputs = 8
    hid_features = 32

    # Node feature matrix (data.x). edge_index / data.weight / data.batch are
    # not needed: ChebConv with K=1 never touches the graph structure.
    x = jax.random.normal(kx, (num_nodes, n_inputs), dtype=jnp.float32)
    params = init_params(kp, n_inputs, n_outputs, hid_features)

    out = gnn_forward(x, params, node_block=4096)
    out = jax.block_until_ready(out)

    ref = gnn_reference(x, params)
    assert out.shape == (num_nodes, n_outputs)
    assert jnp.allclose(out, ref, atol=1e-3, rtol=1e-3), "mismatch vs reference"

    print("KERNEL_OK")
</pallas_src>

<mosaic_0001>
module attributes {stable_mosaic.version = 11 : i64} {
  func.func @gnn_kernel(%arg0: i32, %arg1: memref<512x16xf32, #tpu.memory_space<vmem>>, %arg2: memref<32x16xbf16, #tpu.memory_space<vmem>>, %arg3: memref<32x1xf32, #tpu.memory_space<vmem>>, %arg4: memref<32x32xbf16, #tpu.memory_space<vmem>>, %arg5: memref<32x1xf32, #tpu.memory_space<vmem>>, %arg6: memref<8x32xbf16, #tpu.memory_space<vmem>>, %arg7: memref<8x1xf32, #tpu.memory_space<vmem>>, %arg8: memref<512x8xf32, #tpu.memory_space<vmem>>) attributes {dimension_semantics = [#tpu.dimension_semantics<parallel>], iteration_bounds = array<i64: 2>, scalar_prefetch = 0 : i64, scratch_operands = 0 : i64, tpu.core_type = #tpu.core_type<tc>, window_params = [{transform_indices = @transform_0, window_bounds = array<i64: 512, 16>}, {pipeline_mode = #tpu.pipeline_mode<synchronous>, transform_indices = @transform_1, window_bounds = array<i64: 32, 16>}, {pipeline_mode = #tpu.pipeline_mode<synchronous>, transform_indices = @transform_2, window_bounds = array<i64: 32, 1>}, {pipeline_mode = #tpu.pipeline_mode<synchronous>, transform_indices = @transform_3, window_bounds = array<i64: 32, 32>}, {pipeline_mode = #tpu.pipeline_mode<synchronous>, transform_indices = @transform_4, window_bounds = array<i64: 32, 1>}, {pipeline_mode = #tpu.pipeline_mode<synchronous>, transform_indices = @transform_5, window_bounds = array<i64: 8, 32>}, {pipeline_mode = #tpu.pipeline_mode<synchronous>, transform_indices = @transform_6, window_bounds = array<i64: 8, 1>}, {transform_indices = @transform_7, window_bounds = array<i64: 512, 8>}]} {
    %c0 = arith.constant 0 : index
    %c0_0 = arith.constant 0 : index
    %0 = vector.load %arg1[%c0, %c0_0] : memref<512x16xf32, #tpu.memory_space<vmem>>, vector<512x16xf32>
    %1 = tpu.transpose %0, [1, 0] : vector<512x16xf32> -> vector<16x512xf32>
    %2 = arith.truncf %1 : vector<16x512xf32> to vector<16x512xbf16>
    %c0_1 = arith.constant 0 : index
    %c0_2 = arith.constant 0 : index
    %3 = vector.load %arg2[%c0_1, %c0_2] : memref<32x16xbf16, #tpu.memory_space<vmem>>, vector<32x16xbf16>
    %cst = arith.constant dense<0.000000e+00> : vector<32x512xf32>
    %4 = tpu.matmul %3, %2, %cst {dimension_numbers = #tpu.dot_dimension_numbers<[1], [0], [0], [1], [0, 0, 1, 1], [], []>} : vector<32x16xbf16>, vector<16x512xbf16>, vector<32x512xf32> -> vector<32x512xf32>
    %c0_3 = arith.constant 0 : index
    %c0_4 = arith.constant 0 : index
    %5 = vector.load %arg3[%c0_3, %c0_4] : memref<32x1xf32, #tpu.memory_space<vmem>>, vector<32x1xf32>
    %6 = vector.broadcast %5 : vector<32x1xf32> to vector<32x512xf32>
    %7 = arith.addf %4, %6 : vector<32x512xf32>
    %cst_5 = arith.constant 0.000000e+00 : f32
    %8 = vector.broadcast %cst_5 : f32 to vector<32x512xf32>
    %9 = arith.maximumf %7, %8 : vector<32x512xf32>
    %10 = arith.truncf %9 : vector<32x512xf32> to vector<32x512xbf16>
    %c0_6 = arith.constant 0 : index
    %c0_7 = arith.constant 0 : index
    %11 = vector.load %arg4[%c0_6, %c0_7] : memref<32x32xbf16, #tpu.memory_space<vmem>>, vector<32x32xbf16>
    %cst_8 = arith.constant dense<0.000000e+00> : vector<32x512xf32>
    %12 = tpu.matmul %11, %10, %cst_8 {dimension_numbers = #tpu.dot_dimension_numbers<[1], [0], [0], [1], [0, 0, 1, 1], [], []>} : vector<32x32xbf16>, vector<32x512xbf16>, vector<32x512xf32> -> vector<32x512xf32>
    %c0_9 = arith.constant 0 : index
    %c0_10 = arith.constant 0 : index
    %13 = vector.load %arg5[%c0_9, %c0_10] : memref<32x1xf32, #tpu.memory_space<vmem>>, vector<32x1xf32>
    %14 = vector.broadcast %13 : vector<32x1xf32> to vector<32x512xf32>
    %15 = arith.addf %12, %14 : vector<32x512xf32>
    %cst_11 = arith.constant 0.000000e+00 : f32
    %16 = vector.broadcast %cst_11 : f32 to vector<32x512xf32>
    %17 = arith.maximumf %15, %16 : vector<32x512xf32>
    %18 = arith.truncf %17 : vector<32x512xf32> to vector<32x512xbf16>
    %c0_12 = arith.constant 0 : index
    %c0_13 = arith.constant 0 : index
    %19 = vector.load %arg6[%c0_12, %c0_13] : memref<8x32xbf16, #tpu.memory_space<vmem>>, vector<8x32xbf16>
    %cst_14 = arith.constant dense<0.000000e+00> : vector<8x512xf32>
    %20 = tpu.matmul %19, %18, %cst_14 {dimension_numbers = #tpu.dot_dimension_numbers<[1], [0], [0], [1], [0, 0, 1, 1], [], []>} : vector<8x32xbf16>, vector<32x512xbf16>, vector<8x512xf32> -> vector<8x512xf32>
    %c0_15 = arith.constant 0 : index
    %c0_16 = arith.constant 0 : index
    %21 = vector.load %arg7[%c0_15, %c0_16] : memref<8x1xf32, #tpu.memory_space<vmem>>, vector<8x1xf32>
    %22 = vector.broadcast %21 : vector<8x1xf32> to vector<8x512xf32>
    %23 = arith.addf %20, %22 : vector<8x512xf32>
    %24 = tpu.transpose %23, [1, 0] : vector<8x512xf32> -> vector<512x8xf32>
    %c0_17 = arith.constant 0 : index
    %c0_18 = arith.constant 0 : index
    %25 = vector.load %arg8[%c0_17, %c0_18] : memref<512x8xf32, #tpu.memory_space<vmem>>, vector<512x8xf32>
    tpu.vector_store %arg8[%c0_17, %c0_18], %24 {strides = array<i32>} : memref<512x8xf32, #tpu.memory_space<vmem>>, vector<512x8xf32>,
    return
  }
  func.func @transform_0(%arg0: i32) -> (i32, i32) {
    %c0_i32 = arith.constant 0 : i32
    %c0_i32_0 = arith.constant 0 : i32
    return %arg0, %c0_i32 : i32, i32
  }
  func.func @transform_1(%arg0: i32) -> (i32, i32) {
    %c0_i32 = arith.constant 0 : i32
    %c0_i32_0 = arith.constant 0 : i32
    %c0_i32_1 = arith.constant 0 : i32
    return %c0_i32, %c0_i32_0 : i32, i32
  }
  func.func @transform_2(%arg0: i32) -> (i32, i32) {
    %c0_i32 = arith.constant 0 : i32
    %c0_i32_0 = arith.constant 0 : i32
    %c0_i32_1 = arith.constant 0 : i32
    return %c0_i32, %c0_i32_0 : i32, i32
  }
  func.func @transform_3(%arg0: i32) -> (i32, i32) {
    %c0_i32 = arith.constant 0 : i32
    %c0_i32_0 = arith.constant 0 : i32
    %c0_i32_1 = arith.constant 0 : i32
    return %c0_i32, %c0_i32_0 : i32, i32
  }
  func.func @transform_4(%arg0: i32) -> (i32, i32) {
    %c0_i32 = arith.constant 0 : i32
    %c0_i32_0 = arith.constant 0 : i32
    %c0_i32_1 = arith.constant 0 : i32
    return %c0_i32, %c0_i32_0 : i32, i32
  }
  func.func @transform_5(%arg0: i32) -> (i32, i32) {
    %c0_i32 = arith.constant 0 : i32
    %c0_i32_0 = arith.constant 0 : i32
    %c0_i32_1 = arith.constant 0 : i32
    return %c0_i32, %c0_i32_0 : i32, i32
  }
  func.func @transform_6(%arg0: i32) -> (i32, i32) {
    %c0_i32 = arith.constant 0 : i32
    %c0_i32_0 = arith.constant 0 : i32
    %c0_i32_1 = arith.constant 0 : i32
    return %c0_i32, %c0_i32_0 : i32, i32
  }
  func.func @transform_7(%arg0: i32) -> (i32, i32) {
    %c0_i32 = arith.constant 0 : i32
    %c0_i32_0 = arith.constant 0 : i32
    return %arg0, %c0_i32 : i32, i32
  }
}

</mosaic_0001>

<llo_original>
// kernel: tpu_custom_call.1
$region0: #{tpu_custom_call.1}
  #allocation0 [shape = 'u32[]', space=smem, size = 0x4, offset = 0x4, fixed_abs, tag = 'smem constant byte address 0x4 - core index']
  #allocation1 [shape = 'u32[144,128]{1,0:T(1,128)}', space=vmem, size = 0x12000, scoped, tag = 'internal scratch']
  %s0 = inlined_call_operand.vmem [shape: f32[640,16], index: 0, kind: input, shape index: {}]
  %s1 = inlined_call_operand.vmem [shape: bf16[32,16], index: 1, kind: input, shape index: {}]
  %s2 = inlined_call_operand.vmem [shape: f32[32,1], index: 2, kind: input, shape index: {}]
  %s3 = inlined_call_operand.vmem [shape: bf16[32,32], index: 3, kind: input, shape index: {}]
  %s4 = inlined_call_operand.vmem [shape: f32[32,1], index: 4, kind: input, shape index: {}]
  %s5 = inlined_call_operand.vmem [shape: bf16[8,32], index: 5, kind: input, shape index: {}]
  %s6 = inlined_call_operand.vmem [shape: f32[8,1], index: 6, kind: input, shape index: {}]
  %s7 = inlined_call_operand.vmem [shape: f32[640,8], index: 7, kind: output, shape index: {}]
  %s8 = sld [smem:[#allocation0]]
  $region109: #{tpu_custom_call.1} parent=0
    _
  %s10 = ssub.s32 1, %s8
  %s11 = scalar_select 0, %s10, %s8
  $region1: #{tpu_custom_call.1} parent=0
    #allocation2 [shape = 'u8[524288]{0}', space=vmem, size = 0x80000, scoped, tag = 'output window, operand 0']
    loop: start=0, step=1, limit=4
    $region2: #{tpu_custom_call.1} parent=1 // loop_pre_header
      _
    $region3: #{tpu_custom_call.1} parent=1 // loop_header
      %s13 = sphi 0, %s17
      %p14 = scmp.ge.s32.totalorder %s13, 4
      %s23 = sphi 0, %s25
      %s26 = sphi 0, %s23
      %s27 = sphi 0, %s26
      %s43 = sphi 0, %s27
      %s47 = sphi 0, %s47
      %s49 = sphi 0, %s47
      %s50 = sphi 0, %s49
      %s64 = sphi 0, %s50
      %s68 = sphi 0, %s68
      %s70 = sphi 0, %s68
      %s71 = sphi 0, %s70
      %s85 = sphi 0, %s71
      %s89 = sphi 0, %s89
      %s91 = sphi 0, %s89
      %s92 = sphi 0, %s91
      %s106 = sphi 0, %s92
      %s110 = sphi 0, %s110
      %s112 = sphi 0, %s110
      %s113 = sphi 0, %s112
      %s127 = sphi 0, %s113
      %s131 = sphi 0, %s131
      %s133 = sphi 0, %s131
      %s134 = sphi 0, %s133
      %s148 = sphi 0, %s134
      %s152 = sphi 0, %s152
      %s154 = sphi 0, %s152
      %s155 = sphi 0, %s154
      %s169 = sphi 0, %s155
      %s175 = sphi 0, %s177
      %s178 = sphi 0, %s175
      %s179 = sphi 0, %s178
      %s195 = sphi 0, %s179
    $region4: #{tpu_custom_call.1} parent=1 // loop_header_branch
      %16 = sbr.rel (%p14) target = $region8
    $region5: #{tpu_custom_call.1} parent=1 // loop_body
      %s18 = ssub.s32 %s13, 1
      %s19 = ssub.s32 %s13, 2
      %s20 = sadd.s32 %s13, 1
      %s21 = ssub.s32 %s13, %s20
      %p22 = scmp.eq.s32.totalorder %s21, 0
      %s24 = sadd.s32 %s23, 1
      %s25 = scalar_select %p22, %s23, %s24
      %p28 = pneg %p22
      %p29 = scmp.eq.s32.totalorder %s13, 1
      %p30 = por %p28, %p29
      %p31 = scmp.ne.s32.totalorder %s23, %s26
      %p32 = scmp.eq.s32.totalorder %s13, 0
      %p33 = por %p31, %p32
      %p34 = scmp.ne.s32.totalorder %s23, %s26
      %p35 = scmp.eq.s32.totalorder %s18, 1
      %p36 = por %p34, %p35
      %p37 = scmp.ne.s32.totalorder %s26, %s27
      %p38 = scmp.eq.s32.totalorder %s18, 0
      %p39 = por %p37, %p38
      %p40 = scmp.ne.s32.totalorder %s26, %s27
      %p41 = scmp.eq.s32.totalorder %s19, 1
      %p42 = por %p40, %p41
      %p44 = scmp.ne.s32.totalorder %s27, %s43
      %p45 = scmp.eq.s32.totalorder %s19, 0
      %p46 = por %p44, %p45
      %s48 = sadd.s32 %s47, 1
      %p51 = scmp.eq.s32.totalorder %s13, 1
      %p52 = scmp.ne.s32.totalorder %s47, %s49
      %p53 = scmp.eq.s32.totalorder %s13, 0
      %p54 = por %p52, %p53
      %p55 = scmp.ne.s32.totalorder %s47, %s49
      %p56 = scmp.eq.s32.totalorder %s18, 1
      %p57 = por %p55, %p56
      %p58 = scmp.ne.s32.totalorder %s49, %s50
      %p59 = scmp.eq.s32.totalorder %s18, 0
      %p60 = por %p58, %p59
      %p61 = scmp.ne.s32.totalorder %s49, %s50
      %p62 = scmp.eq.s32.totalorder %s19, 1
      %p63 = por %p61, %p62
      %p65 = scmp.ne.s32.totalorder %s50, %s64
      %p66 = scmp.eq.s32.totalorder %s19, 0
      %p67 = por %p65, %p66
      %s69 = sadd.s32 %s68, 1
      %p72 = scmp.eq.s32.totalorder %s13, 1
      %p73 = scmp.ne.s32.totalorder %s68, %s70
      %p74 = scmp.eq.s32.totalorder %s13, 0
      %p75 = por %p73, %p74
      %p76 = scmp.ne.s32.totalorder %s68, %s70
      %p77 = scmp.eq.s32.totalorder %s18, 1
      %p78 = por %p76, %p77
      %p79 = scmp.ne.s32.totalorder %s70, %s71
      %p80 = scmp.eq.s32.totalorder %s18, 0
      %p81 = por %p79, %p80
      %p82 = scmp.ne.s32.totalorder %s70, %s71
      %p83 = scmp.eq.s32.totalorder %s19, 1
      %p84 = por %p82, %p83
      %p86 = scmp.ne.s32.totalorder %s71, %s85
      %p87 = scmp.eq.s32.totalorder %s19, 0
      %p88 = por %p86, %p87
      %s90 = sadd.s32 %s89, 1
      %p93 = scmp.eq.s32.totalorder %s13, 1
      %p94 = scmp.ne.s32.totalorder %s89, %s91
      %p95 = scmp.eq.s32.totalorder %s13, 0
      %p96 = por %p94, %p95
      %p97 = scmp.ne.s32.totalorder %s89, %s91
      %p98 = scmp.eq.s32.totalorder %s18, 1
      %p99 = por %p97, %p98
      %p100 = scmp.ne.s32.totalorder %s91, %s92
      %p101 = scmp.eq.s32.totalorder %s18, 0
      %p102 = por %p100, %p101
      %p103 = scmp.ne.s32.totalorder %s91, %s92
      %p104 = scmp.eq.s32.totalorder %s19, 1
      %p105 = por %p103, %p104
      %p107 = scmp.ne.s32.totalorder %s92, %s106
      %p108 = scmp.eq.s32.totalorder %s19, 0
      %p109 = por %p107, %p108
      %s111 = sadd.s32 %s110, 1
      %p114 = scmp.eq.s32.totalorder %s13, 1
      %p115 = scmp.ne.s32.totalorder %s110, %s112
      %p116 = scmp.eq.s32.totalorder %s13, 0
      %p117 = por %p115, %p116
      %p118 = scmp.ne.s32.totalorder %s110, %s112
      %p119 = scmp.eq.s32.totalorder %s18, 1
      %p120 = por %p118, %p119
      %p121 = scmp.ne.s32.totalorder %s112, %s113
      %p122 = scmp.eq.s32.totalorder %s18, 0
      %p123 = por %p121, %p122
      %p124 = scmp.ne.s32.totalorder %s112, %s113
      %p125 = scmp.eq.s32.totalorder %s19, 1
      %p126 = por %p124, %p125
      %p128 = scmp.ne.s32.totalorder %s113, %s127
      %p129 = scmp.eq.s32.totalorder %s19, 0
      %p130 = por %p128, %p129
      %s132 = sadd.s32 %s131, 1
      %p135 = scmp.eq.s32.totalorder %s13, 1
      %p136 = scmp.ne.s32.totalorder %s131, %s133
      %p137 = scmp.eq.s32.totalorder %s13, 0
      %p138 = por %p136, %p137
      %p139 = scmp.ne.s32.totalorder %s131, %s133
      %p140 = scmp.eq.s32.totalorder %s18, 1
      %p141 = por %p139, %p140
      %p142 = scmp.ne.s32.totalorder %s133, %s134
      %p143 = scmp.eq.s32.totalorder %s18, 0
      %p144 = por %p142, %p143
      %p145 = scmp.ne.s32.totalorder %s133, %s134
      %p146 = scmp.eq.s32.totalorder %s19, 1
      %p147 = por %p145, %p146
      %p149 = scmp.ne.s32.totalorder %s134, %s148
      %p150 = scmp.eq.s32.totalorder %s19, 0
      %p151 = por %p149, %p150
      %s153 = sadd.s32 %s152, 1
      %p156 = scmp.eq.s32.totalorder %s13, 1
      %p157 = scmp.ne.s32.totalorder %s152, %s154
      %p158 = scmp.eq.s32.totalorder %s13, 0
      %p159 = por %p157, %p158
      %p160 = scmp.ne.s32.totalorder %s152, %s154
      %p161 = scmp.eq.s32.totalorder %s18, 1
      %p162 = por %p160, %p161
      %p163 = scmp.ne.s32.totalorder %s154, %s155
      %p164 = scmp.eq.s32.totalorder %s18, 0
      %p165 = por %p163, %p164
      %p166 = scmp.ne.s32.totalorder %s154, %s155
      %p167 = scmp.eq.s32.totalorder %s19, 1
      %p168 = por %p166, %p167
      %p170 = scmp.ne.s32.totalorder %s155, %s169
      %p171 = scmp.eq.s32.totalorder %s19, 0
      %p172 = por %p170, %p171
      %s173 = ssub.s32 %s13, %s20
      %p174 = scmp.eq.s32.totalorder %s173, 0
      %s176 = sadd.s32 %s175, 1
      %s177 = scalar_select %p174, %s175, %s176
      %p180 = pneg %p174
      %p181 = scmp.eq.s32.totalorder %s13, 1
      %p182 = por %p180, %p181
      %p183 = scmp.ne.s32.totalorder %s175, %s178
      %p184 = scmp.eq.s32.totalorder %s13, 0
      %p185 = por %p183, %p184
      %p186 = scmp.ne.s32.totalorder %s175, %s178
      %p187 = scmp.eq.s32.totalorder %s18, 1
      %p188 = por %p186, %p187
      %p189 = scmp.ne.s32.totalorder %s178, %s179
      %p190 = scmp.eq.s32.totalorder %s18, 0
      %p191 = por %p189, %p190
      %p192 = scmp.ne.s32.totalorder %s178, %s179
      %p193 = scmp.eq.s32.totalorder %s19, 1
      %p194 = por %p192, %p193
      %p196 = scmp.ne.s32.totalorder %s179, %s195
      %p197 = scmp.eq.s32.totalorder %s19, 0
      %p198 = por %p196, %p197
      %p199 = scmp.le.s32.totalorder 1, %s13
      %p200 = scmp.lt.s32.totalorder %s13, 3
      %p201 = pnand %p199, %p200
      %p202 = pneg %p201
      // Predicated region
      $region9: #{tpu_custom_call.1} parent=5 // pred_check
        _
      $region10: #{tpu_custom_call.1} parent=5 // pred_check_branch
        %204 = sbr.rel (%p201) target = $region12
      $region11: #{tpu_custom_call.1} parent=5 // pred_region
        %s205 = ssub.s32 %s13, 1
        // Predicated region
        $region13: #{tpu_custom_call.1} parent=11 // pred_check
          %p206 = pneg %p60
        $region14: #{tpu_custom_call.1} parent=11 // pred_check_branch
          %208 = sbr.rel (%p206) target = $region16
        $region15: #{tpu_custom_call.1} parent=11 // pred_region
          _
        $region16: #{tpu_custom_call.1} parent=11 // pred_fallthru
          _
        // Predicated region
        $region17: #{tpu_custom_call.1} parent=11 // pred_check
          %p209 = pneg %p81
        $region18: #{tpu_custom_call.1} parent=11 // pred_check_branch
          %211 = sbr.rel (%p209) target = $region20
        $region19: #{tpu_custom_call.1} parent=11 // pred_region
          _
        $region20: #{tpu_custom_call.1} parent=11 // pred_fallthru
          _
        // Predicated region
        $region21: #{tpu_custom_call.1} parent=11 // pred_check
          %p212 = pneg %p102
        $region22: #{tpu_custom_call.1} parent=11 // pred_check_branch
          %214 = sbr.rel (%p212) target = $region24
        $region23: #{tpu_custom_call.1} parent=11 // pred_region
          _
        $region24: #{tpu_custom_call.1} parent=11 // pred_fallthru
          _
        // Predicated region
        $region25: #{tpu_custom_call.1} parent=11 // pred_check
          %p215 = pneg %p123
        $region26: #{tpu_custom_call.1} parent=11 // pred_check_branch
          %217 = sbr.rel (%p215) target = $region28
        $region27: #{tpu_custom_call.1} parent=11 // pred_region
          _
        $region28: #{tpu_custom_call.1} parent=11 // pred_fallthru
          _
        // Predicated region
        $region29: #{tpu_custom_call.1} parent=11 // pred_check
          %p218 = pneg %p144
        $region30: #{tpu_custom_call.1} parent=11 // pred_check_branch
          %220 = sbr.rel (%p218) target = $region32
        $region31: #{tpu_custom_call.1} parent=11 // pred_region
          _
        $region32: #{tpu_custom_call.1} parent=11 // pred_fallthru
          _
        // Predicated region
        $region33: #{tpu_custom_call.1} parent=11 // pred_check
          %p221 = pneg %p165
        $region34: #{tpu_custom_call.1} parent=11 // pred_check_branch
          %223 = sbr.rel (%p221) target = $region36
        $region35: #{tpu_custom_call.1} parent=11 // pred_region
          _
        $region36: #{tpu_custom_call.1} parent=11 // pred_fallthru
          _
      $region12: #{tpu_custom_call.1} parent=5 // pred_fallthru
        _
      %p224 = scmp.lt.s32.totalorder %s13, 2
      // Predicated region
      $region37: #{tpu_custom_call.1} parent=5 // pred_check
        %p225 = pneg %p224
      $region38: #{tpu_custom_call.1} parent=5 // pred_check_branch
        %227 = sbr.rel (%p225) target = $region40
      $region39: #{tpu_custom_call.1} parent=5 // pred_region
        // Predicated region
        $region41: #{tpu_custom_call.1} parent=39 // pred_check
          %p228 = pneg %p33
        $region42: #{tpu_custom_call.1} parent=39 // pred_check_branch
          %230 = sbr.rel (%p228) target = $region44
        $region43: #{tpu_custom_call.1} parent=39 // pred_region
          %s231 = smul.u32 64, %s13
          %s232 = ssub.s32 80, %s231
          %p233 = scmp.lt.s32.totalorder %s232, 64
          %s234 = scalar_select %p233, %s232, 64
          %s235 = smul.u32 128, %s234
          %p236 = scmp.lt.s32.totalorder %s231, 79
          %s237 = scalar_select %p236, %s231, 79
          %s238 = smul.addr %s237, 8
          %s239 = scalar_lea.vmem %s0, %s238
          %s240 = smul.u32 64, %s13
          %s241 = ssub.s32 80, %s240
          %p242 = scmp.lt.s32.totalorder %s241, 64
          %s243 = scalar_select %p242, %s241, 64
          %s244 = smul.u32 128, %s243
        $region44: #{tpu_custom_call.1} parent=39 // pred_fallthru
          _
      $region40: #{tpu_custom_call.1} parent=5 // pred_fallthru
        _
      %p245 = scmp.le.s32.totalorder 1, %s13
      %p246 = scmp.lt.s32.totalorder %s13, 3
      %p247 = pnand %p245, %p246
      %p248 = pneg %p247
      // Predicated region
      $region45: #{tpu_custom_call.1} parent=5 // pred_check
        _
      $region46: #{tpu_custom_call.1} parent=5 // pred_check_branch
        %250 = sbr.rel (%p247) target = $region48
      $region47: #{tpu_custom_call.1} parent=5 // pred_region
        %s251 = ssub.s32 %s13, 1
        %s252 = smul.u32 64, %s18
        %s253 = ssub.s32 80, %s252
        %p254 = scmp.lt.s32.totalorder %s253, 64
        %s255 = scalar_select %p254, %s253, 64
        %s256 = smul.u32 128, %s255
        %p257 = scmp.lt.s32.totalorder %s252, 79
        %s258 = scalar_select %p257, %s252, 79
        %s259 = smul.addr %s258, 8
        %s260 = scalar_lea.vmem %s0, %s259
        %p261 = pneg %p39
        %p262 = pneg %p36
        %p263 = pneg %p60
        %p264 = pneg %p57
        %p265 = pneg %p81
        %p266 = pneg %p78
        %p267 = pneg %p102
        %p268 = pneg %p99
        %p269 = pneg %p123
        %p270 = pneg %p120
        %p271 = pneg %p144
        %p272 = pneg %p141
        %p273 = pneg %p165
        %p274 = pneg %p162
        %p275 = pneg %p191
        %p276 = pneg %p188
        %s277 = sand.u32 %s178, 1
        %s278 = sand.u32 %s178, 1
        %s279 = smul.addr %s278, 512
        %s280 = scalar_lea.vmem [#allocation2], %s279
        %s281 = smul.u32 64, %s18
        %s282 = ssub.s32 80, %s281
        %p283 = scmp.lt.s32.totalorder %s282, 64
        %s284 = scalar_select %p283, %s282, 64
        %s285 = smul.u32 128, %s284
        %p286 = scmp.lt.s32.totalorder %s281, 79
        %s287 = scalar_select %p286, %s281, 79
        %s288 = smul.addr %s287, 8
        %s289 = scalar_lea.vmem %s0, %s288
        %s290 = smul.u32 64, %s18
        %s291 = ssub.s32 80, %s290
        %p292 = scmp.lt.s32.totalorder %s291, 64
        %s293 = scalar_select %p292, %s291, 64
        %s294 = smul.u32 128, %s293
        %s295 = smul.u32 64, %s18
        %s296 = ssub.s32 80, %s295
        %p297 = scmp.lt.s32.totalorder %s296, 64
        %s298 = scalar_select %p297, %s296, 64
        %s299 = smul.u32 128, %s298
        %v301 = vld [vmem:[%s289] sm:$0xff]
        %v302 = vld [vmem:[%s289 + $0x8] sm:$0xff]
        %v303 = vld [vmem:[%s289 + $0x10] sm:$0xff]
        %v304 = vld [vmem:[%s289 + $0x18] sm:$0xff]
        %v305 = vld [vmem:[%s289 + $0x20] sm:$0xff]
        %v306 = vld [vmem:[%s289 + $0x28] sm:$0xff]
        %v307 = vld [vmem:[%s289 + $0x30] sm:$0xff]
        %v308 = vld [vmem:[%s289 + $0x38] sm:$0xff]
        %v309 = vld [vmem:[%s289 + $0x40] sm:$0xff]
        %v310 = vld [vmem:[%s289 + $0x48] sm:$0xff]
        %v311 = vld [vmem:[%s289 + $0x50] sm:$0xff]
        %v312 = vld [vmem:[%s289 + $0x58] sm:$0xff]
        %v313 = vld [vmem:[%s289 + $0x60] sm:$0xff]
        %v314 = vld [vmem:[%s289 + $0x68] sm:$0xff]
        %v315 = vld [vmem:[%s289 + $0x70] sm:$0xff]
        %v316 = vld [vmem:[%s289 + $0x78] sm:$0xff]
        %v317 = vld [vmem:[%s289 + $0x80] sm:$0xff]
        %v318 = vld [vmem:[%s289 + $0x88] sm:$0xff]
        %v319 = vld [vmem:[%s289 + $0x90] sm:$0xff]
        %v320 = vld [vmem:[%s289 + $0x98] sm:$0xff]
        %v321 = vld [vmem:[%s289 + $0xa0] sm:$0xff]
        %v322 = vld [vmem:[%s289 + $0xa8] sm:$0xff]
        %v323 = vld [vmem:[%s289 + $0xb0] sm:$0xff]
        %v324 = vld [vmem:[%s289 + $0xb8] sm:$0xff]
        %v325 = vld [vmem:[%s289 + $0xc0] sm:$0xff]
        %v326 = vld [vmem:[%s289 + $0xc8] sm:$0xff]
        %v327 = vld [vmem:[%s289 + $0xd0] sm:$0xff]
        %v328 = vld [vmem:[%s289 + $0xd8] sm:$0xff]
        %v329 = vld [vmem:[%s289 + $0xe0] sm:$0xff]
        %v330 = vld [vmem:[%s289 + $0xe8] sm:$0xff]
        %v331 = vld [vmem:[%s289 + $0xf0] sm:$0xff]
        %v332 = vld [vmem:[%s289 + $0xf8] sm:$0xff]
        %v333 = vld [vmem:[%s289 + $0x100] sm:$0xff]
        %v334 = vld [vmem:[%s289 + $0x108] sm:$0xff]
        %v335 = vld [vmem:[%s289 + $0x110] sm:$0xff]
        %v336 = vld [vmem:[%s289 + $0x118] sm:$0xff]
        %v337 = vld [vmem:[%s289 + $0x120] sm:$0xff]
        %v338 = vld [vmem:[%s289 + $0x128] sm:$0xff]
        %v339 = vld [vmem:[%s289 + $0x130] sm:$0xff]
        %v340 = vld [vmem:[%s289 + $0x138] sm:$0xff]
        %v341 = vld [vmem:[%s289 + $0x140] sm:$0xff]
        %v342 = vld [vmem:[%s289 + $0x148] sm:$0xff]
        %v343 = vld [vmem:[%s289 + $0x150] sm:$0xff]
        %v344 = vld [vmem:[%s289 + $0x158] sm:$0xff]
        %v345 = vld [vmem:[%s289 + $0x160] sm:$0xff]
        %v346 = vld [vmem:[%s289 + $0x168] sm:$0xff]
        %v347 = vld [vmem:[%s289 + $0x170] sm:$0xff]
        %v348 = vld [vmem:[%s289 + $0x178] sm:$0xff]
        %v349 = vld [vmem:[%s289 + $0x180] sm:$0xff]
        %v350 = vld [vmem:[%s289 + $0x188] sm:$0xff]
        %v351 = vld [vmem:[%s289 + $0x190] sm:$0xff]
        %v352 = vld [vmem:[%s289 + $0x198] sm:$0xff]
        %v353 = vld [vmem:[%s289 + $0x1a0] sm:$0xff]
        %v354 = vld [vmem:[%s289 + $0x1a8] sm:$0xff]
        %v355 = vld [vmem:[%s289 + $0x1b0] sm:$0xff]
        %v356 = vld [vmem:[%s289 + $0x1b8] sm:$0xff]
        %v357 = vld [vmem:[%s289 + $0x1c0] sm:$0xff]
        %v358 = vld [vmem:[%s289 + $0x1c8] sm:$0xff]
        %v359 = vld [vmem:[%s289 + $0x1d0] sm:$0xff]
        %v360 = vld [vmem:[%s289 + $0x1d8] sm:$0xff]
        %v361 = vld [vmem:[%s289 + $0x1e0] sm:$0xff]
        %v362 = vld [vmem:[%s289 + $0x1e8] sm:$0xff]
        %v363 = vld [vmem:[%s289 + $0x1f0] sm:$0xff]
        %v364 = vld [vmem:[%s289 + $0x1f8] sm:$0xff]
        %365 = vxpose.xlu0.b32.start [1/16] %v301, 128
        %366 = vxpose.xlu0.b32.cont [2/16] %v302, 128
        %367 = vxpose.xlu0.b32.cont [3/16] %v303, 128
        %368 = vxpose.xlu0.b32.cont [4/16] %v304, 128
        %369 = vxpose.xlu0.b32.cont [5/16] %v305, 128
        %370 = vxpose.xlu0.b32.cont [6/16] %v306, 128
        %371 = vxpose.xlu0.b32.cont [7/16] %v307, 128
        %372 = vxpose.xlu0.b32.cont [8/16] %v308, 128
        %373 = vxpose.xlu0.b32.cont [9/16] %v309, 128
        %374 = vxpose.xlu0.b32.cont [10/16] %v310, 128
        %375 = vxpose.xlu0.b32.cont [11/16] %v311, 128
        %376 = vxpose.xlu0.b32.cont [12/16] %v312, 128
        %377 = vxpose.xlu0.b32.cont [13/16] %v313, 128
        %378 = vxpose.xlu0.b32.cont [14/16] %v314, 128
        %379 = vxpose.xlu0.b32.cont [15/16] %v315, 128
        %380 = vxpose.xlu0.b32.end [16/16] %v316, 128
        %v381 = vpop.trf.xlu0
        %v382 = vpop.trf.xlu0
        %v383 = vpop.trf.xlu0
        %v384 = vpop.trf.xlu0
        %v385 = vpop.trf.xlu0
        %v386 = vpop.trf.xlu0
        %v387 = vpop.trf.xlu0
        %v388 = vpop.trf.xlu0
        %v389 = vpop.trf.xlu0
        %v390 = vpop.trf.xlu0
        %v391 = vpop.trf.xlu0
        %v392 = vpop.trf.xlu0
        %v393 = vpop.trf.xlu0
        %v394 = vpop.trf.xlu0
        %v395 = vpop.trf.xlu0
        %v396 = vpop.trf.xlu0
        %397 = vxpose.xlu0.b32.start [1/16] %v317, 128
        %398 = vxpose.xlu0.b32.cont [2/16] %v318, 128
        %399 = vxpose.xlu0.b32.cont [3/16] %v319, 128
        %400 = vxpose.xlu0.b32.cont [4/16] %v320, 128
        %401 = vxpose.xlu0.b32.cont [5/16] %v321, 128
        %402 = vxpose.xlu0.b32.cont [6/16] %v322, 128
        %403 = vxpose.xlu0.b32.cont [7/16] %v323, 128
        %404 = vxpose.xlu0.b32.cont [8/16] %v324, 128
        %405 = vxpose.xlu0.b32.cont [9/16] %v325, 128
        %406 = vxpose.xlu0.b32.cont [10/16] %v326, 128
        %407 = vxpose.xlu0.b32.cont [11/16] %v327, 128
        %408 = vxpose.xlu0.b32.cont [12/16] %v328, 128
        %409 = vxpose.xlu0.b32.cont [13/16] %v329, 128
        %410 = vxpose.xlu0.b32.cont [14/16] %v330, 128
        %411 = vxpose.xlu0.b32.cont [15/16] %v331, 128
        %412 = vxpose.xlu0.b32.end [16/16] %v332, 128
        %v413 = vpop.trf.xlu0
        %v414 = vpop.trf.xlu0
        %v415 = vpop.trf.xlu0
        %v416 = vpop.trf.xlu0
        %v417 = vpop.trf.xlu0
        %v418 = vpop.trf.xlu0
        %v419 = vpop.trf.xlu0
        %v420 = vpop.trf.xlu0
        %v421 = vpop.trf.xlu0
        %v422 = vpop.trf.xlu0
        %v423 = vpop.trf.xlu0
        %v424 = vpop.trf.xlu0
        %v425 = vpop.trf.xlu0
        %v426 = vpop.trf.xlu0
        %v427 = vpop.trf.xlu0
        %v428 = vpop.trf.xlu0
        %429 = vxpose.xlu0.b32.start [1/16] %v333, 128
        %430 = vxpose.xlu0.b32.cont [2/16] %v334, 128
        %431 = vxpose.xlu0.b32.cont [3/16] %v335, 128
        %432 = vxpose.xlu0.b32.cont [4/16] %v336, 128
        %433 = vxpose.xlu0.b32.cont [5/16] %v337, 128
        %434 = vxpose.xlu0.b32.cont [6/16] %v338, 128
        %435 = vxpose.xlu0.b32.cont [7/16] %v339, 128
        %436 = vxpose.xlu0.b32.cont [8/16] %v340, 128
        %437 = vxpose.xlu0.b32.cont [9/16] %v341, 128
        %438 = vxpose.xlu0.b32.cont [10/16] %v342, 128
        %439 = vxpose.xlu0.b32.cont [11/16] %v343, 128
        %440 = vxpose.xlu0.b32.cont [12/16] %v344, 128
        %441 = vxpose.xlu0.b32.cont [13/16] %v345, 128
        %442 = vxpose.xlu0.b32.cont [14/16] %v346, 128
        %443 = vxpose.xlu0.b32.cont [15/16] %v347, 128
        %444 = vxpose.xlu0.b32.end [16/16] %v348, 128
        %v445 = vpop.trf.xlu0
        %v446 = vpop.trf.xlu0
        %v447 = vpop.trf.xlu0
        %v448 = vpop.trf.xlu0
        %v449 = vpop.trf.xlu0
        %v450 = vpop.trf.xlu0
        %v451 = vpop.trf.xlu0
        %v452 = vpop.trf.xlu0
        %v453 = vpop.trf.xlu0
        %v454 = vpop.trf.xlu0
        %v455 = vpop.trf.xlu0
        %v456 = vpop.trf.xlu0
        %v457 = vpop.trf.xlu0
        %v458 = vpop.trf.xlu0
        %v459 = vpop.trf.xlu0
        %v460 = vpop.trf.xlu0
        %461 = vxpose.xlu0.b32.start [1/16] %v349, 128
        %462 = vxpose.xlu0.b32.cont [2/16] %v350, 128
        %463 = vxpose.xlu0.b32.cont [3/16] %v351, 128
        %464 = vxpose.xlu0.b32.cont [4/16] %v352, 128
        %465 = vxpose.xlu0.b32.cont [5/16] %v353, 128
        %466 = vxpose.xlu0.b32.cont [6/16] %v354, 128
        %467 = vxpose.xlu0.b32.cont [7/16] %v355, 128
        %468 = vxpose.xlu0.b32.cont [8/16] %v356, 128
        %469 = vxpose.xlu0.b32.cont [9/16] %v357, 128
        %470 = vxpose.xlu0.b32.cont [10/16] %v358, 128
        %471 = vxpose.xlu0.b32.cont [11/16] %v359, 128
        %472 = vxpose.xlu0.b32.cont [12/16] %v360, 128
        %473 = vxpose.xlu0.b32.cont [13/16] %v361, 128
        %474 = vxpose.xlu0.b32.cont [14/16] %v362, 128
        %475 = vxpose.xlu0.b32.cont [15/16] %v363, 128
        %476 = vxpose.xlu0.b32.end [16/16] %v364, 128
        %v477 = vpop.trf.xlu0
        %v478 = vpop.trf.xlu0
        %v479 = vpop.trf.xlu0
        %v480 = vpop.trf.xlu0
        %v481 = vpop.trf.xlu0
        %v482 = vpop.trf.xlu0
        %v483 = vpop.trf.xlu0
        %v484 = vpop.trf.xlu0
        %v485 = vpop.trf.xlu0
        %v486 = vpop.trf.xlu0
        %v487 = vpop.trf.xlu0
        %v488 = vpop.trf.xlu0
        %v489 = vpop.trf.xlu0
        %v490 = vpop.trf.xlu0
        %v491 = vpop.trf.xlu0
        %v492 = vpop.trf.xlu0
        %v493 = vpack.c.bf16 %v382, %v381
        %v494 = vpack.c.bf16 %v414, %v413
        %v495 = vpack.c.bf16 %v446, %v445
        %v496 = vpack.c.bf16 %v478, %v477
        %v497 = vld [vmem:[%s1] sm:$0xf]
        %v498 = vld [vmem:[%s1 + $0x4] sm:$0xf]
        %v499 = vld [vmem:[%s1 + $0x8] sm:$0xf]
        %v500 = vld [vmem:[%s1 + $0xc] sm:$0xf]
        %v501 = vld [vmem:[%s2] sm:$0xff]
        %v502 = vld [vmem:[%s2 + $0x8] sm:$0xff]
        %v503 = vld [vmem:[%s2 + $0x10] sm:$0xff]
        %v504 = vld [vmem:[%s2 + $0x18] sm:$0xff]
        %506 = vset.pattern.permute.xlu0 0
        %507 = vperm.xlu0 %506, %v501
        %v508 = vpop.permute.xlu0 %507
        %511 = vset.pattern.permute.xlu0 0
        %512 = vperm.xlu0 %511, %v502
        %v513 = vpop.permute.xlu0 %512
        %516 = vset.pattern.permute.xlu0 0
        %517 = vperm.xlu0 %516, %v503
        %v518 = vpop.permute.xlu0 %517
        %521 = vset.pattern.permute.xlu0 0
        %522 = vperm.xlu0 %521, %v504
        %v523 = vpop.permute.xlu0 %522
        %v529 = vunpack.c.l.b16 %v497
        %v530 = vunpack.c.l.b16 %v498
        %v531 = vunpack.c.l.b16 %v499
        %v532 = vunpack.c.l.b16 %v500
        %v533 = vpack.c.b16 %v530, %v529
        %v534 = vpack.c.b16 %v532, %v531
        %vm535 = vcmask 130048
        %v537 = vsel %vm535, %v533, 0
        %v540 = vsel %vm535, %v534, 0
        %542 = vmatprep.subr.bf16.mxu0 %v494
        %543 = vmatpush1.bf16.msra.mxu0 %v493
        %544 = vmatprep.subr.bf16.mxu0 0
        %545 = vmatpush1.bf16.msra.mxu0 0
        %546 = vmatprep.subr.bf16.mxu0 0
        %547 = vmatpush1.bf16.msra.mxu0 0
        %548 = vmatprep.subr.bf16.mxu0 0
        %549 = vmatpush1.bf16.msra.mxu0 0
        %550 = vmatprep.subr.bf16.mxu0 0
        %551 = vmatpush1.bf16.msra.mxu0 0
        %552 = vmatprep.subr.bf16.mxu0 0
        %553 = vmatpush1.bf16.msra.mxu0 0
        %554 = vmatprep.subr.bf16.mxu0 0
        %555 = vmatpush1.bf16.msra.mxu0 0
        %556 = vmatprep.subr.bf16.mxu0 0
        %557 = vmatpush1.bf16.msra.mxu0 0
        %558 = vmatprep.subr.bf16.mxu0 0
        %559 = vmatpush1.bf16.msra.mxu0 0
        %560 = vmatprep.subr.bf16.mxu0 0
        %561 = vmatpush1.bf16.msra.mxu0 0
        %562 = vmatprep.subr.bf16.mxu0 0
        %563 = vmatpush1.bf16.msra.mxu0 0
        %564 = vmatprep.subr.bf16.mxu0 0
        %565 = vmatpush1.bf16.msra.mxu0 0
        %566 = vmatprep.subr.bf16.mxu0 0
        %567 = vmatpush1.bf16.msra.mxu0 0
        %568 = vmatprep.subr.bf16.mxu0 0
        %569 = vmatpush1.bf16.msra.mxu0 0
        %570 = vmatprep.subr.bf16.mxu0 0
        %571 = vmatpush1.bf16.msra.mxu0 0
        %572 = vmatprep.subr.bf16.mxu0 0
        %573 = vmatpush1.bf16.msra.mxu0 0
        %574 = vmatprep.mubr.bf16.mxu0 0
        %575 = vmatmul.mubr.bf16.gmra.mrb[0].mxu0 %v537
        %v576 = vpop.f32.mrb[0].mxu0
        %v577 = vadd.f32 %v508, %v576
        %v578 = vpop.f32.mrb[0].mxu0
        %v579 = vadd.f32 %v508, %v578
        %v580 = vpop.f32.mrb[0].mxu0
        %v581 = vadd.f32 %v513, %v580
        %v582 = vpop.f32.mrb[0].mxu0
        %v583 = vadd.f32 %v513, %v582
        %584 = vmatprep.mubr.bf16.mxu0 0
        %585 = vmatmul.mubr.bf16.gmra.mrb[0].mxu0 %v540
        %v586 = vpop.f32.mrb[0].mxu0
        %v587 = vadd.f32 %v518, %v586
        %v588 = vpop.f32.mrb[0].mxu0
        %v589 = vadd.f32 %v518, %v588
        %v590 = vpop.f32.mrb[0].mxu0
        %v591 = vadd.f32 %v523, %v590
        %v592 = vpop.f32.mrb[0].mxu0
        %v593 = vadd.f32 %v523, %v592
        %594 = vdwg.mxu0
        %595 = vmatprep.subr.bf16.mxu0 %v496
        %596 = vmatpush1.bf16.msra.mxu0 %v495
        %597 = vmatprep.subr.bf16.mxu0 0
        %598 = vmatpush1.bf16.msra.mxu0 0
        %599 = vmatprep.subr.bf16.mxu0 0
        %600 = vmatpush1.bf16.msra.mxu0 0
        %601 = vmatprep.subr.bf16.mxu0 0
        %602 = vmatpush1.bf16.msra.mxu0 0
        %603 = vmatprep.subr.bf16.mxu0 0
        %604 = vmatpush1.bf16.msra.mxu0 0
        %605 = vmatprep.subr.bf16.mxu0 0
        %606 = vmatpush1.bf16.msra.mxu0 0
        %607 = vmatprep.subr.bf16.mxu0 0
        %608 = vmatpush1.bf16.msra.mxu0 0
        %609 = vmatprep.subr.bf16.mxu0 0
        %610 = vmatpush1.bf16.msra.mxu0 0
        %611 = vmatprep.subr.bf16.mxu0 0
        %612 = vmatpush1.bf16.msra.mxu0 0
        %613 = vmatprep.subr.bf16.mxu0 0
        %614 = vmatpush1.bf16.msra.mxu0 0
        %615 = vmatprep.subr.bf16.mxu0 0
        %616 = vmatpush1.bf16.msra.mxu0 0
        %617 = vmatprep.subr.bf16.mxu0 0
        %618 = vmatpush1.bf16.msra.mxu0 0
        %619 = vmatprep.subr.bf16.mxu0 0
        %620 = vmatpush1.bf16.msra.mxu0 0
        %621 = vmatprep.subr.bf16.mxu0 0
        %622 = vmatpush1.bf16.msra.mxu0 0
        %623 = vmatprep.subr.bf16.mxu0 0
        %624 = vmatpush1.bf16.msra.mxu0 0
        %625 = vmatprep.subr.bf16.mxu0 0
        %626 = vmatpush1.bf16.msra.mxu0 0
        %627 = vmatprep.mubr.bf16.mxu0 0
        %628 = vmatmul.mubr.bf16.gmra.mrb[0].mxu0 %v537
        %v629 = vpop.f32.mrb[0].mxu0
        %v630 = vadd.f32 %v508, %v629
        %v631 = vpop.f32.mrb[0].mxu0
        %v632 = vadd.f32 %v508, %v631
        %v633 = vpop.f32.mrb[0].mxu0
        %v634 = vadd.f32 %v513, %v633
        %v635 = vpop.f32.mrb[0].mxu0
        %v636 = vadd.f32 %v513, %v635
        %637 = vmatprep.mubr.bf16.mxu0 0
        %638 = vmatmul.mubr.bf16.gmra.mrb[0].mxu0 %v540
        %v639 = vpop.f32.mrb[0].mxu0
        %v640 = vadd.f32 %v518, %v639
        %v641 = vpop.f32.mrb[0].mxu0
        %v642 = vadd.f32 %v518, %v641
        %v643 = vpop.f32.mrb[0].mxu0
        %v644 = vadd.f32 %v523, %v643
        %v645 = vpop.f32.mrb[0].mxu0
        %v646 = vadd.f32 %v523, %v645
        %647 = vdwg.mxu0
        %v648 = vmax.f32 %v577, 0.0
        %v649 = vmax.f32 %v579, 0.0
        %v650 = vmax.f32 %v630, 0.0
        %v651 = vmax.f32 %v632, 0.0
        %v652 = vmax.f32 %v581, 0.0
        %v653 = vmax.f32 %v583, 0.0
        %v654 = vmax.f32 %v634, 0.0
        %v655 = vmax.f32 %v636, 0.0
        %v656 = vmax.f32 %v587, 0.0
        %v657 = vmax.f32 %v589, 0.0
        %v658 = vmax.f32 %v640, 0.0
        %v659 = vmax.f32 %v642, 0.0
        %v660 = vmax.f32 %v591, 0.0
        %v661 = vmax.f32 %v593, 0.0
        %v662 = vmax.f32 %v644, 0.0
        %v663 = vmax.f32 %v646, 0.0
        %v664 = vpack.c.bf16 %v652, %v648
        %v665 = vpack.c.bf16 %v653, %v649
        %v666 = vpack.c.bf16 %v654, %v650
        %v667 = vpack.c.bf16 %v655, %v651
        %v668 = vpack.c.bf16 %v660, %v656
        %v669 = vpack.c.bf16 %v661, %v657
        %v670 = vpack.c.bf16 %v662, %v658
        %v671 = vpack.c.bf16 %v663, %v659
        %v672 = vld [vmem:[%s3] sm:$0xf]
        %v673 = vld [vmem:[%s3 + $0x4] sm:$0xf]
        %v674 = vld [vmem:[%s3 + $0x8] sm:$0xf]
        %v675 = vld [vmem:[%s3 + $0xc] sm:$0xf]
        %v676 = vld [vmem:[%s4] sm:$0xff]
        %v677 = vld [vmem:[%s4 + $0x8] sm:$0xff]
        %v678 = vld [vmem:[%s4 + $0x10] sm:$0xff]
        %v679 = vld [vmem:[%s4 + $0x18] sm:$0xff]
        %681 = vset.pattern.permute.xlu0 0
        %682 = vperm.xlu0 %681, %v676
        %v683 = vpop.permute.xlu0 %682
        %686 = vset.pattern.permute.xlu0 0
        %687 = vperm.xlu0 %686, %v677
        %v688 = vpop.permute.xlu0 %687
        %691 = vset.pattern.permute.xlu0 0
        %692 = vperm.xlu0 %691, %v678
        %v693 = vpop.permute.xlu0 %692
        %696 = vset.pattern.permute.xlu0 0
        %697 = vperm.xlu0 %696, %v679
        %v698 = vpop.permute.xlu0 %697
        %v704 = vunpack.c.l.b16 %v672
        %v705 = vunpack.c.l.b16 %v673
        %v706 = vunpack.c.l.b16 %v674
        %v707 = vunpack.c.l.b16 %v675
        %v708 = vpack.c.b16 %v705, %v704
        %v709 = vpack.c.b16 %v707, %v706
        %vm710 = vcmask 261120
        %v712 = vsel %vm710, %v708, 0
        %v715 = vsel %vm710, %v709, 0
        %717 = vmatprep.subr.bf16.mxu0 %v665
        %718 = vmatpush1.bf16.msra.mxu0 %v664
        %719 = vmatprep.subr.bf16.mxu0 %v669
        %720 = vmatpush1.bf16.msra.mxu0 %v668
        %721 = vmatprep.subr.bf16.mxu0 0
        %722 = vmatpush1.bf16.msra.mxu0 0
        %723 = vmatprep.subr.bf16.mxu0 0
        %724 = vmatpush1.bf16.msra.mxu0 0
        %725 = vmatprep.subr.bf16.mxu0 0
        %726 = vmatpush1.bf16.msra.mxu0 0
        %727 = vmatprep.subr.bf16.mxu0 0
        %728 = vmatpush1.bf16.msra.mxu0 0
        %729 = vmatprep.subr.bf16.mxu0 0
        %730 = vmatpush1.bf16.msra.mxu0 0
        %731 = vmatprep.subr.bf16.mxu0 0
        %732 = vmatpush1.bf16.msra.mxu0 0
        %733 = vmatprep.subr.bf16.mxu0 0
        %734 = vmatpush1.bf16.msra.mxu0 0
        %735 = vmatprep.subr.bf16.mxu0 0
        %736 = vmatpush1.bf16.msra.mxu0 0
        %737 = vmatprep.subr.bf16.mxu0 0
        %738 = vmatpush1.bf16.msra.mxu0 0
        %739 = vmatprep.subr.bf16.mxu0 0
        %740 = vmatpush1.bf16.msra.mxu0 0
        %741 = vmatprep.subr.bf16.mxu0 0
        %742 = vmatpush1.bf16.msra.mxu0 0
        %743 = vmatprep.subr.bf16.mxu0 0
        %744 = vmatpush1.bf16.msra.mxu0 0
        %745 = vmatprep.subr.bf16.mxu0 0
        %746 = vmatpush1.bf16.msra.mxu0 0
        %747 = vmatprep.subr.bf16.mxu0 0
        %748 = vmatpush1.bf16.msra.mxu0 0
        %749 = vmatprep.mubr.bf16.mxu0 0
        %750 = vmatmul.mubr.bf16.gmra.mrb[0].mxu0 %v712
        %v751 = vpop.f32.mrb[0].mxu0
        %v752 = vadd.f32 %v683, %v751
        %v753 = vpop.f32.mrb[0].mxu0
        %v754 = vadd.f32 %v683, %v753
        %v755 = vpop.f32.mrb[0].mxu0
        %v756 = vadd.f32 %v688, %v755
        %v757 = vpop.f32.mrb[0].mxu0
        %v758 = vadd.f32 %v688, %v757
        %759 = vmatprep.mubr.bf16.mxu0 0
        %760 = vmatmul.mubr.bf16.gmra.mrb[0].mxu0 %v715
        %v761 = vpop.f32.mrb[0].mxu0
        %v762 = vadd.f32 %v693, %v761
        %v763 = vpop.f32.mrb[0].mxu0
        %v764 = vadd.f32 %v693, %v763
        %v765 = vpop.f32.mrb[0].mxu0
        %v766 = vadd.f32 %v698, %v765
        %v767 = vpop.f32.mrb[0].mxu0
        %v768 = vadd.f32 %v698, %v767
        %769 = vdwg.mxu0
        %770 = vmatprep.subr.bf16.mxu0 %v667
        %771 = vmatpush1.bf16.msra.mxu0 %v666
        %772 = vmatprep.subr.bf16.mxu0 %v671
        %773 = vmatpush1.bf16.msra.mxu0 %v670
        %774 = vmatprep.subr.bf16.mxu0 0
        %775 = vmatpush1.bf16.msra.mxu0 0
        %776 = vmatprep.subr.bf16.mxu0 0
        %777 = vmatpush1.bf16.msra.mxu0 0
        %778 = vmatprep.subr.bf16.mxu0 0
        %779 = vmatpush1.bf16.msra.mxu0 0
        %780 = vmatprep.subr.bf16.mxu0 0
        %781 = vmatpush1.bf16.msra.mxu0 0
        %782 = vmatprep.subr.bf16.mxu0 0
        %783 = vmatpush1.bf16.msra.mxu0 0
        %784 = vmatprep.subr.bf16.mxu0 0
        %785 = vmatpush1.bf16.msra.mxu0 0
        %786 = vmatprep.subr.bf16.mxu0 0
        %787 = vmatpush1.bf16.msra.mxu0 0
        %788 = vmatprep.subr.bf16.mxu0 0
        %789 = vmatpush1.bf16.msra.mxu0 0
        %790 = vmatprep.subr.bf16.mxu0 0
        %791 = vmatpush1.bf16.msra.mxu0 0
        %792 = vmatprep.subr.bf16.mxu0 0
        %793 = vmatpush1.bf16.msra.mxu0 0
        %794 = vmatprep.subr.bf16.mxu0 0
        %795 = vmatpush1.bf16.msra.mxu0 0
        %796 = vmatprep.subr.bf16.mxu0 0
        %797 = vmatpush1.bf16.msra.mxu0 0
        %798 = vmatprep.subr.bf16.mxu0 0
        %799 = vmatpush1.bf16.msra.mxu0 0
        %800 = vmatprep.subr.bf16.mxu0 0
        %801 = vmatpush1.bf16.msra.mxu0 0
        %802 = vmatprep.mubr.bf16.mxu0 0
        %803 = vmatmul.mubr.bf16.gmra.mrb[0].mxu0 %v712
        %v804 = vpop.f32.mrb[0].mxu0
        %v805 = vadd.f32 %v683, %v804
        %v806 = vpop.f32.mrb[0].mxu0
        %v807 = vadd.f32 %v683, %v806
        %v808 = vpop.f32.mrb[0].mxu0
        %v809 = vadd.f32 %v688, %v808
        %v810 = vpop.f32.mrb[0].mxu0
        %v811 = vadd.f32 %v688, %v810
        %812 = vmatprep.mubr.bf16.mxu0 0
        %813 = vmatmul.mubr.bf16.gmra.mrb[0].mxu0 %v715
        %v814 = vpop.f32.mrb[0].mxu0
        %v815 = vadd.f32 %v693, %v814
        %v816 = vpop.f32.mrb[0].mxu0
        %v817 = vadd.f32 %v693, %v816
        %v818 = vpop.f32.mrb[0].mxu0
        %v819 = vadd.f32 %v698, %v818
        %v820 = vpop.f32.mrb[0].mxu0
        %v821 = vadd.f32 %v698, %v820
        %822 = vdwg.mxu0
        %v823 = vmax.f32 %v752, 0.0
        %v824 = vmax.f32 %v754, 0.0
        %v825 = vmax.f32 %v805, 0.0
        %v826 = vmax.f32 %v807, 0.0
        %v827 = vmax.f32 %v756, 0.0
        %v828 = vmax.f32 %v758, 0.0
        %v829 = vmax.f32 %v809, 0.0
        %v830 = vmax.f32 %v811, 0.0
        %v831 = vmax.f32 %v762, 0.0
        %v832 = vmax.f32 %v764, 0.0
        %v833 = vmax.f32 %v815, 0.0
        %v834 = vmax.f32 %v817, 0.0
        %v835 = vmax.f32 %v766, 0.0
        %v836 = vmax.f32 %v768, 0.0
        %v837 = vmax.f32 %v819, 0.0
        %v838 = vmax.f32 %v821, 0.0
        %v839 = vpack.c.bf16 %v827, %v823
        %v840 = vpack.c.bf16 %v828, %v824
        %v841 = vpack.c.bf16 %v829, %v825
        %v842 = vpack.c.bf16 %v830, %v826
        %v843 = vpack.c.bf16 %v835, %v831
        %v844 = vpack.c.bf16 %v836, %v832
        %v845 = vpack.c.bf16 %v837, %v833
        %v846 = vpack.c.bf16 %v838, %v834
        %v847 = vld [vmem:[%s5] sm:$0xf]
        %v848 = vld [vmem:[%s6] sm:$0xff]
        %850 = vset.pattern.permute.xlu0 0
        %851 = vperm.xlu0 %850, %v848
        %v852 = vpop.permute.xlu0 %851
        %v855 = vsel %vm710, %v847, 0
        %857 = vmatprep.subr.bf16.mxu0 %v840
        %858 = vmatpush1.bf16.msra.mxu0 %v839
        %859 = vmatprep.subr.bf16.mxu0 %v844
        %860 = vmatpush1.bf16.msra.mxu0 %v843
        %861 = vmatprep.subr.bf16.mxu0 0
        %862 = vmatpush1.bf16.msra.mxu0 0
        %863 = vmatprep.subr.bf16.mxu0 0
        %864 = vmatpush1.bf16.msra.mxu0 0
        %865 = vmatprep.subr.bf16.mxu0 0
        %866 = vmatpush1.bf16.msra.mxu0 0
        %867 = vmatprep.subr.bf16.mxu0 0
        %868 = vmatpush1.bf16.msra.mxu0 0
        %869 = vmatprep.subr.bf16.mxu0 0
        %870 = vmatpush1.bf16.msra.mxu0 0
        %871 = vmatprep.subr.bf16.mxu0 0
        %872 = vmatpush1.bf16.msra.mxu0 0
        %873 = vmatprep.subr.bf16.mxu0 0
        %874 = vmatpush1.bf16.msra.mxu0 0
        %875 = vmatprep.subr.bf16.mxu0 0
        %876 = vmatpush1.bf16.msra.mxu0 0
        %877 = vmatprep.subr.bf16.mxu0 0
        %878 = vmatpush1.bf16.msra.mxu0 0
        %879 = vmatprep.subr.bf16.mxu0 0
        %880 = vmatpush1.bf16.msra.mxu0 0
        %881 = vmatprep.subr.bf16.mxu0 0
        %882 = vmatpush1.bf16.msra.mxu0 0
        %883 = vmatprep.subr.bf16.mxu0 0
        %884 = vmatpush1.bf16.msra.mxu0 0
        %885 = vmatprep.subr.bf16.mxu0 0
        %886 = vmatpush1.bf16.msra.mxu0 0
        %887 = vmatprep.subr.bf16.mxu0 0
        %888 = vmatpush1.bf16.msra.mxu0 0
        %889 = vmatprep.mubr.bf16.mxu0 0
        %890 = vmatmul.mubr.bf16.gmra.mrb[0].mxu0 %v855
        %v891 = vpop.f32.mrb[0].mxu0
        %v892 = vadd.f32 %v852, %v891
        %v893 = vpop.f32.mrb[0].mxu0
        %v894 = vadd.f32 %v852, %v893
        %v895 = vpop.f32.mrb[0].mxu0
        %v896 = vpop.f32.mrb[0].mxu0
        %897 = vdwg.mxu0
        %898 = vmatprep.subr.bf16.mxu0 %v842
        %899 = vmatpush1.bf16.msra.mxu0 %v841
        %900 = vmatprep.subr.bf16.mxu0 %v846
        %901 = vmatpush1.bf16.msra.mxu0 %v845
        %902 = vmatprep.subr.bf16.mxu0 0
        %903 = vmatpush1.bf16.msra.mxu0 0
        %904 = vmatprep.subr.bf16.mxu0 0
        %905 = vmatpush1.bf16.msra.mxu0 0
        %906 = vmatprep.subr.bf16.mxu0 0
        %907 = vmatpush1.bf16.msra.mxu0 0
        %908 = vmatprep.subr.bf16.mxu0 0
        %909 = vmatpush1.bf16.msra.mxu0 0
        %910 = vmatprep.subr.bf16.mxu0 0
        %911 = vmatpush1.bf16.msra.mxu0 0
        %912 = vmatprep.subr.bf16.mxu0 0
        %913 = vmatpush1.bf16.msra.mxu0 0
        %914 = vmatprep.subr.bf16.mxu0 0
        %915 = vmatpush1.bf16.msra.mxu0 0
        %916 = vmatprep.subr.bf16.mxu0 0
        %917 = vmatpush1.bf16.msra.mxu0 0
        %918 = vmatprep.subr.bf16.mxu0 0
        %919 = vmatpush1.bf16.msra.mxu0 0
        %920 = vmatprep.subr.bf16.mxu0 0
        %921 = vmatpush1.bf16.msra.mxu0 0
        %922 = vmatprep.subr.bf16.mxu0 0
        %923 = vmatpush1.bf16.msra.mxu0 0
        %924 = vmatprep.subr.bf16.mxu0 0
        %925 = vmatpush1.bf16.msra.mxu0 0
        %926 = vmatprep.subr.bf16.mxu0 0
        %927 = vmatpush1.bf16.msra.mxu0 0
        %928 = vmatprep.subr.bf16.mxu0 0
        %929 = vmatpush1.bf16.msra.mxu0 0
        %930 = vmatprep.mubr.bf16.mxu0 0
        %931 = vmatmul.mubr.bf16.gmra.mrb[0].mxu0 %v855
        %v932 = vpop.f32.mrb[0].mxu0
        %v933 = vadd.f32 %v852, %v932
        %v934 = vpop.f32.mrb[0].mxu0
        %v935 = vadd.f32 %v852, %v934
        %v936 = vpop.f32.mrb[0].mxu0
        %v937 = vpop.f32.mrb[0].mxu0
        %938 = vdwg.mxu0
        %939 = vxpose.xlu0.b32.start [1/16] %v892, 128
        %940 = vxpose.xlu0.b32.cont [2/16] 0.0, 128
        %941 = vxpose.xlu0.b32.cont [3/16] 0.0, 128
        %942 = vxpose.xlu0.b32.cont [4/16] 0.0, 128
        %943 = vxpose.xlu0.b32.cont [5/16] 0.0, 128
        %944 = vxpose.xlu0.b32.cont [6/16] 0.0, 128
        %945 = vxpose.xlu0.b32.cont [7/16] 0.0, 128
        %946 = vxpose.xlu0.b32.cont [8/16] 0.0, 128
        %947 = vxpose.xlu0.b32.cont [9/16] 0.0, 128
        %948 = vxpose.xlu0.b32.cont [10/16] 0.0, 128
        %949 = vxpose.xlu0.b32.cont [11/16] 0.0, 128
        %950 = vxpose.xlu0.b32.cont [12/16] 0.0, 128
        %951 = vxpose.xlu0.b32.cont [13/16] 0.0, 128
        %952 = vxpose.xlu0.b32.cont [14/16] 0.0, 128
        %953 = vxpose.xlu0.b32.cont [15/16] 0.0, 128
        %954 = vxpose.xlu0.b32.end [16/16] 0.0, 128
        %v955 = vpop.trf.xlu0
        %v956 = vpop.trf.xlu0
        %v957 = vpop.trf.xlu0
        %v958 = vpop.trf.xlu0
        %v959 = vpop.trf.xlu0
        %v960 = vpop.trf.xlu0
        %v961 = vpop.trf.xlu0
        %v962 = vpop.trf.xlu0
        %v963 = vpop.trf.xlu0
        %v964 = vpop.trf.xlu0
        %v965 = vpop.trf.xlu0
        %v966 = vpop.trf.xlu0
        %v967 = vpop.trf.xlu0
        %v968 = vpop.trf.xlu0
        %v969 = vpop.trf.xlu0
        %v970 = vpop.trf.xlu0
        %971 = vxpose.xlu0.b32.start [1/16] %v894, 128
        %972 = vxpose.xlu0.b32.cont [2/16] 0.0, 128
        %973 = vxpose.xlu0.b32.cont [3/16] 0.0, 128
        %974 = vxpose.xlu0.b32.cont [4/16] 0.0, 128
        %975 = vxpose.xlu0.b32.cont [5/16] 0.0, 128
        %976 = vxpose.xlu0.b32.cont [6/16] 0.0, 128
        %977 = vxpose.xlu0.b32.cont [7/16] 0.0, 128
        %978 = vxpose.xlu0.b32.cont [8/16] 0.0, 128
        %979 = vxpose.xlu0.b32.cont [9/16] 0.0, 128
        %980 = vxpose.xlu0.b32.cont [10/16] 0.0, 128
        %981 = vxpose.xlu0.b32.cont [11/16] 0.0, 128
        %982 = vxpose.xlu0.b32.cont [12/16] 0.0, 128
        %983 = vxpose.xlu0.b32.cont [13/16] 0.0, 128
        %984 = vxpose.xlu0.b32.cont [14/16] 0.0, 128
        %985 = vxpose.xlu0.b32.cont [15/16] 0.0, 128
        %986 = vxpose.xlu0.b32.end [16/16] 0.0, 128
        %v987 = vpop.trf.xlu0
        %v988 = vpop.trf.xlu0
        %v989 = vpop.trf.xlu0
        %v990 = vpop.trf.xlu0
        %v991 = vpop.trf.xlu0
        %v992 = vpop.trf.xlu0
        %v993 = vpop.trf.xlu0
        %v994 = vpop.trf.xlu0
        %v995 = vpop.trf.xlu0
        %v996 = vpop.trf.xlu0
        %v997 = vpop.trf.xlu0
        %v998 = vpop.trf.xlu0
        %v999 = vpop.trf.xlu0
        %v1000 = vpop.trf.xlu0
        %v1001 = vpop.trf.xlu0
        %v1002 = vpop.trf.xlu0
        %1003 = vxpose.xlu0.b32.start [1/16] %v933, 128
        %1004 = vxpose.xlu0.b32.cont [2/16] 0.0, 128
        %1005 = vxpose.xlu0.b32.cont [3/16] 0.0, 128
        %1006 = vxpose.xlu0.b32.cont [4/16] 0.0, 128
        %1007 = vxpose.xlu0.b32.cont [5/16] 0.0, 128
        %1008 = vxpose.xlu0.b32.cont [6/16] 0.0, 128
        %1009 = vxpose.xlu0.b32.cont [7/16] 0.0, 128
        %1010 = vxpose.xlu0.b32.cont [8/16] 0.0, 128
        %1011 = vxpose.xlu0.b32.cont [9/16] 0.0, 128
        %1012 = vxpose.xlu0.b32.cont [10/16] 0.0, 128
        %1013 = vxpose.xlu0.b32.cont [11/16] 0.0, 128
        %1014 = vxpose.xlu0.b32.cont [12/16] 0.0, 128
        %1015 = vxpose.xlu0.b32.cont [13/16] 0.0, 128
        %1016 = vxpose.xlu0.b32.cont [14/16] 0.0, 128
        %1017 = vxpose.xlu0.b32.cont [15/16] 0.0, 128
        %1018 = vxpose.xlu0.b32.end [16/16] 0.0, 128
        %v1019 = vpop.trf.xlu0
        %v1020 = vpop.trf.xlu0
        %v1021 = vpop.trf.xlu0
        %v1022 = vpop.trf.xlu0
        %v1023 = vpop.trf.xlu0
        %v1024 = vpop.trf.xlu0
        %v1025 = vpop.trf.xlu0
        %v1026 = vpop.trf.xlu0
        %v1027 = vpop.trf.xlu0
        %v1028 = vpop.trf.xlu0
        %v1029 = vpop.trf.xlu0
        %v1030 = vpop.trf.xlu0
        %v1031 = vpop.trf.xlu0
        %v1032 = vpop.trf.xlu0
        %v1033 = vpop.trf.xlu0
        %v1034 = vpop.trf.xlu0
        %1035 = vxpose.xlu0.b32.start [1/16] %v935, 128
        %1036 = vxpose.xlu0.b32.cont [2/16] 0.0, 128
        %1037 = vxpose.xlu0.b32.cont [3/16] 0.0, 128
        %1038 = vxpose.xlu0.b32.cont [4/16] 0.0, 128
        %1039 = vxpose.xlu0.b32.cont [5/16] 0.0, 128
        %1040 = vxpose.xlu0.b32.cont [6/16] 0.0, 128
        %1041 = vxpose.xlu0.b32.cont [7/16] 0.0, 128
        %1042 = vxpose.xlu0.b32.cont [8/16] 0.0, 128
        %1043 = vxpose.xlu0.b32.cont [9/16] 0.0, 128
        %1044 = vxpose.xlu0.b32.cont [10/16] 0.0, 128
        %1045 = vxpose.xlu0.b32.cont [11/16] 0.0, 128
        %1046 = vxpose.xlu0.b32.cont [12/16] 0.0, 128
        %1047 = vxpose.xlu0.b32.cont [13/16] 0.0, 128
        %1048 = vxpose.xlu0.b32.cont [14/16] 0.0, 128
        %1049 = vxpose.xlu0.b32.cont [15/16] 0.0, 128
        %1050 = vxpose.xlu0.b32.end [16/16] 0.0, 128
        %v1051 = vpop.trf.xlu0
        %v1052 = vpop.trf.xlu0
        %v1053 = vpop.trf.xlu0
        %v1054 = vpop.trf.xlu0
        %v1055 = vpop.trf.xlu0
        %v1056 = vpop.trf.xlu0
        %v1057 = vpop.trf.xlu0
        %v1058 = vpop.trf.xlu0
        %v1059 = vpop.trf.xlu0
        %v1060 = vpop.trf.xlu0
        %v1061 = vpop.trf.xlu0
        %v1062 = vpop.trf.xlu0
        %v1063 = vpop.trf.xlu0
        %v1064 = vpop.trf.xlu0
        %v1065 = vpop.trf.xlu0
        %v1066 = vpop.trf.xlu0
        %vm1067 = vcmask 64512
        %1068 = vst.msk [vmem:[%s280] sm:$0xff] %vm1067, %v955
        %1069 = vst.msk [vmem:[%s280 + $0x8] sm:$0xff] %vm1067, %v956
        %1070 = vst.msk [vmem:[%s280 + $0x10] sm:$0xff] %vm1067, %v957
        %1071 = vst.msk [vmem:[%s280 + $0x18] sm:$0xff] %vm1067, %v958
        %1072 = vst.msk [vmem:[%s280 + $0x20] sm:$0xff] %vm1067, %v959
        %1073 = vst.msk [vmem:[%s280 + $0x28] sm:$0xff] %vm1067, %v960
        %1074 = vst.msk [vmem:[%s280 + $0x30] sm:$0xff] %vm1067, %v961
        %1075 = vst.msk [vmem:[%s280 + $0x38] sm:$0xff] %vm1067, %v962
        %1076 = vst.msk [vmem:[%s280 + $0x40] sm:$0xff] %vm1067, %v963
        %1077 = vst.msk [vmem:[%s280 + $0x48] sm:$0xff] %vm1067, %v964
        %1078 = vst.msk [vmem:[%s280 + $0x50] sm:$0xff] %vm1067, %v965
        %1079 = vst.msk [vmem:[%s280 + $0x58] sm:$0xff] %vm1067, %v966
        %1080 = vst.msk [vmem:[%s280 + $0x60] sm:$0xff] %vm1067, %v967
        %1081 = vst.msk [vmem:[%s280 + $0x68] sm:$0xff] %vm1067, %v968
        %1082 = vst.msk [vmem:[%s280 + $0x70] sm:$0xff] %vm1067, %v969
        %1083 = vst.msk [vmem:[%s280 + $0x78] sm:$0xff] %vm1067, %v970
        %1084 = vst.msk [vmem:[%s280 + $0x80] sm:$0xff] %vm1067, %v987
        %1085 = vst.msk [vmem:[%s280 + $0x88] sm:$0xff] %vm1067, %v988
        %1086 = vst.msk [vmem:[%s280 + $0x90] sm:$0xff] %vm1067, %v989
        %1087 = vst.msk [vmem:[%s280 + $0x98] sm:$0xff] %vm1067, %v990
        %1088 = vst.msk [vmem:[%s280 + $0xa0] sm:$0xff] %vm1067, %v991
        %1089 = vst.msk [vmem:[%s280 + $0xa8] sm:$0xff] %vm1067, %v992
        %1090 = vst.msk [vmem:[%s280 + $0xb0] sm:$0xff] %vm1067, %v993
        %1091 = vst.msk [vmem:[%s280 + $0xb8] sm:$0xff] %vm1067, %v994
        %1092 = vst.msk [vmem:[%s280 + $0xc0] sm:$0xff] %vm1067, %v995
        %1093 = vst.msk [vmem:[%s280 + $0xc8] sm:$0xff] %vm1067, %v996
        %1094 = vst.msk [vmem:[%s280 + $0xd0] sm:$0xff] %vm1067, %v997
        %1095 = vst.msk [vmem:[%s280 + $0xd8] sm:$0xff] %vm1067, %v998
        %1096 = vst.msk [vmem:[%s280 + $0xe0] sm:$0xff] %vm1067, %v999
        %1097 = vst.msk [vmem:[%s280 + $0xe8] sm:$0xff] %vm1067, %v1000
        %1098 = vst.msk [vmem:[%s280 + $0xf0] sm:$0xff] %vm1067, %v1001
        %1099 = vst.msk [vmem:[%s280 + $0xf8] sm:$0xff] %vm1067, %v1002
        %1100 = vst.msk [vmem:[%s280 + $0x100] sm:$0xff] %vm1067, %v1019
        %1101 = vst.msk [vmem:[%s280 + $0x108] sm:$0xff] %vm1067, %v1020
        %1102 = vst.msk [vmem:[%s280 + $0x110] sm:$0xff] %vm1067, %v1021
        %1103 = vst.msk [vmem:[%s280 + $0x118] sm:$0xff] %vm1067, %v1022
        %1104 = vst.msk [vmem:[%s280 + $0x120] sm:$0xff] %vm1067, %v1023
        %1105 = vst.msk [vmem:[%s280 + $0x128] sm:$0xff] %vm1067, %v1024
        %1106 = vst.msk [vmem:[%s280 + $0x130] sm:$0xff] %vm1067, %v1025
        %1107 = vst.msk [vmem:[%s280 + $0x138] sm:$0xff] %vm1067, %v1026
        %1108 = vst.msk [vmem:[%s280 + $0x140] sm:$0xff] %vm1067, %v1027
        %1109 = vst.msk [vmem:[%s280 + $0x148] sm:$0xff] %vm1067, %v1028
        %1110 = vst.msk [vmem:[%s280 + $0x150] sm:$0xff] %vm1067, %v1029
        %1111 = vst.msk [vmem:[%s280 + $0x158] sm:$0xff] %vm1067, %v1030
        %1112 = vst.msk [vmem:[%s280 + $0x160] sm:$0xff] %vm1067, %v1031
        %1113 = vst.msk [vmem:[%s280 + $0x168] sm:$0xff] %vm1067, %v1032
        %1114 = vst.msk [vmem:[%s280 + $0x170] sm:$0xff] %vm1067, %v1033
        %1115 = vst.msk [vmem:[%s280 + $0x178] sm:$0xff] %vm1067, %v1034
        %1116 = vst.msk [vmem:[%s280 + $0x180] sm:$0xff] %vm1067, %v1051
        %1117 = vst.msk [vmem:[%s280 + $0x188] sm:$0xff] %vm1067, %v1052
        %1118 = vst.msk [vmem:[%s280 + $0x190] sm:$0xff] %vm1067, %v1053
        %1119 = vst.msk [vmem:[%s280 + $0x198] sm:$0xff] %vm1067, %v1054
        %1120 = vst.msk [vmem:[%s280 + $0x1a0] sm:$0xff] %vm1067, %v1055
        %1121 = vst.msk [vmem:[%s280 + $0x1a8] sm:$0xff] %vm1067, %v1056
        %1122 = vst.msk [vmem:[%s280 + $0x1b0] sm:$0xff] %vm1067, %v1057
        %1123 = vst.msk [vmem:[%s280 + $0x1b8] sm:$0xff] %vm1067, %v1058
        %1124 = vst.msk [vmem:[%s280 + $0x1c0] sm:$0xff] %vm1067, %v1059
        %1125 = vst.msk [vmem:[%s280 + $0x1c8] sm:$0xff] %vm1067, %v1060
        %1126 = vst.msk [vmem:[%s280 + $0x1d0] sm:$0xff] %vm1067, %v1061
        %1127 = vst.msk [vmem:[%s280 + $0x1d8] sm:$0xff] %vm1067, %v1062
        %1128 = vst.msk [vmem:[%s280 + $0x1e0] sm:$0xff] %vm1067, %v1063
        %1129 = vst.msk [vmem:[%s280 + $0x1e8] sm:$0xff] %vm1067, %v1064
        %1130 = vst.msk [vmem:[%s280 + $0x1f0] sm:$0xff] %vm1067, %v1065
        %1131 = vst.msk [vmem:[%s280 + $0x1f8] sm:$0xff] %vm1067, %v1066
        %s1132 = sand.u32 %s178, 1
        %s1133 = sand.u32 %s178, 1
        %s1134 = smul.addr %s1133, 512
        %s1135 = scalar_lea.vmem [#allocation2], %s1134
        // Predicated region
        $region49: #{tpu_custom_call.1} parent=47 // pred_check
          %p1136 = pneg %p188
        $region50: #{tpu_custom_call.1} parent=47 // pred_check_branch
          %1138 = sbr.rel (%p1136) target = $region52
        $region51: #{tpu_custom_call.1} parent=47 // pred_region
          %s1139 = smul.u32 64, %s18
          %s1140 = ssub.s32 80, %s1139
          %p1141 = scmp.lt.s32.totalorder %s1140, 64
          %s1142 = scalar_select %p1141, %s1140, 64
          %s1143 = smul.u32 128, %s1142
          %p1144 = scmp.ne.s32.totalorder 0, %s1143
          %s1145 = smul.addr %s1139, 8
          %s1146 = scalar_lea.vmem %s7, %s1145
          // Predicated region
          $region53: #{tpu_custom_call.1} parent=51 // pred_check
            %p1147 = pneg %p1144
          $region54: #{tpu_custom_call.1} parent=51 // pred_check_branch
            %1149 = sbr.rel (%p1147) target = $region56
          $region55: #{tpu_custom_call.1} parent=51 // pred_region
            // Predicated region
            $region57: #{tpu_custom_call.1} parent=55 // pred_check
              _
            $region58: #{tpu_custom_call.1} parent=55 // pred_check_branch
              %1151 = sbr.rel (0) target = $region60
            $region59: #{tpu_custom_call.1} parent=55 // pred_region
              // Predicated region
              $region79: #{tpu_custom_call.1} parent=59 // pred_check
                _
              $region80: #{tpu_custom_call.1} parent=59 // pred_check_branch
                %1326 = sbr.rel (0) target = $region82
              $region81: #{tpu_custom_call.1} parent=59 // pred_region
                %s1327 = sshrl.u32 %s1142, 6
                // While loop
                $region83: #{tpu_custom_call.1} parent=81 // loop_pre_header
                  _
                $region84: #{tpu_custom_call.1} parent=81 // loop_header
                  %s1329 = sphi 0, %s1331
                  %p1330 = scmp.ge.s32.totalorder %s1329, %s1327
                  %s1334 = sphi 0, %s1467
                  %s1335 = sphi %s1135, %s1470
                  %s1336 = sphi %s1146, %s1471
                $region85: #{tpu_custom_call.1} parent=81 // loop_header_branch
                  %1333 = sbr.rel (%p1330) target = $region89
                $region86: #{tpu_custom_call.1} parent=81 // loop_body
                  %v1337 = vld [vmem:[%s1335] sm:$0xff]
                  %1338 = vst [vmem:[%s1336] sm:$0xff] %v1337
                  %v1339 = vld [vmem:[%s1335 + $0x8] sm:$0xff]
                  %1340 = vst [vmem:[%s1336 + $0x8] sm:$0xff] %v1339
                  %v1341 = vld [vmem:[%s1335 + $0x10] sm:$0xff]
                  %1342 = vst [vmem:[%s1336 + $0x10] sm:$0xff] %v1341
                  %v1343 = vld [vmem:[%s1335 + $0x18] sm:$0xff]
                  %1344 = vst [vmem:[%s1336 + $0x18] sm:$0xff] %v1343
                  %v1345 = vld [vmem:[%s1335 + $0x20] sm:$0xff]
                  %1346 = vst [vmem:[%s1336 + $0x20] sm:$0xff] %v1345
                  %v1347 = vld [vmem:[%s1335 + $0x28] sm:$0xff]
                  %1348 = vst [vmem:[%s1336 + $0x28] sm:$0xff] %v1347
                  %v1349 = vld [vmem:[%s1335 + $0x30] sm:$0xff]
                  %1350 = vst [vmem:[%s1336 + $0x30] sm:$0xff] %v1349
                  %v1351 = vld [vmem:[%s1335 + $0x38] sm:$0xff]
                  %1352 = vst [vmem:[%s1336 + $0x38] sm:$0xff] %v1351
                  %v1353 = vld [vmem:[%s1335 + $0x40] sm:$0xff]
                  %1354 = vst [vmem:[%s1336 + $0x40] sm:$0xff] %v1353
                  %v1355 = vld [vmem:[%s1335 + $0x48] sm:$0xff]
                  %1356 = vst [vmem:[%s1336 + $0x48] sm:$0xff] %v1355
                  %v1357 = vld [vmem:[%s1335 + $0x50] sm:$0xff]
                  %1358 = vst [vmem:[%s1336 + $0x50] sm:$0xff] %v1357
                  %v1359 = vld [vmem:[%s1335 + $0x58] sm:$0xff]
                  %1360 = vst [vmem:[%s1336 + $0x58] sm:$0xff] %v1359
                  %v1361 = vld [vmem:[%s1335 + $0x60] sm:$0xff]
                  %1362 = vst [vmem:[%s1336 + $0x60] sm:$0xff] %v1361
                  %v1363 = vld [vmem:[%s1335 + $0x68] sm:$0xff]
                  %1364 = vst [vmem:[%s1336 + $0x68] sm:$0xff] %v1363
                  %v1365 = vld [vmem:[%s1335 + $0x70] sm:$0xff]
                  %1366 = vst [vmem:[%s1336 + $0x70] sm:$0xff] %v1365
                  %v1367 = vld [vmem:[%s1335 + $0x78] sm:$0xff]
                  %1368 = vst [vmem:[%s1336 + $0x78] sm:$0xff] %v1367
                  %v1369 = vld [vmem:[%s1335 + $0x80] sm:$0xff]
                  %1370 = vst [vmem:[%s1336 + $0x80] sm:$0xff] %v1369
                  %v1371 = vld [vmem:[%s1335 + $0x88] sm:$0xff]
                  %1372 = vst [vmem:[%s1336 + $0x88] sm:$0xff] %v1371
                  %v1373 = vld [vmem:[%s1335 + $0x90] sm:$0xff]
                  %1374 = vst [vmem:[%s1336 + $0x90] sm:$0xff] %v1373
                  %v1375 = vld [vmem:[%s1335 + $0x98] sm:$0xff]
                  %1376 = vst [vmem:[%s1336 + $0x98] sm:$0xff] %v1375
                  %v1377 = vld [vmem:[%s1335 + $0xa0] sm:$0xff]
                  %1378 = vst [vmem:[%s1336 + $0xa0] sm:$0xff] %v1377
                  %v1379 = vld [vmem:[%s1335 + $0xa8] sm:$0xff]
                  %1380 = vst [vmem:[%s1336 + $0xa8] sm:$0xff] %v1379
                  %v1381 = vld [vmem:[%s1335 + $0xb0] sm:$0xff]
                  %1382 = vst [vmem:[%s1336 + $0xb0] sm:$0xff] %v1381
                  %v1383 = vld [vmem:[%s1335 + $0xb8] sm:$0xff]
                  %1384 = vst [vmem:[%s1336 + $0xb8] sm:$0xff] %v1383
                  %v1385 = vld [vmem:[%s1335 + $0xc0] sm:$0xff]
                  %1386 = vst [vmem:[%s1336 + $0xc0] sm:$0xff] %v1385
                  %v1387 = vld [vmem:[%s1335 + $0xc8] sm:$0xff]
                  %1388 = vst [vmem:[%s1336 + $0xc8] sm:$0xff] %v1387
                  %v1389 = vld [vmem:[%s1335 + $0xd0] sm:$0xff]
                  %1390 = vst [vmem:[%s1336 + $0xd0] sm:$0xff] %v1389
                  %v1391 = vld [vmem:[%s1335 + $0xd8] sm:$0xff]
                  %1392 = vst [vmem:[%s1336 + $0xd8] sm:$0xff] %v1391
                  %v1393 = vld [vmem:[%s1335 + $0xe0] sm:$0xff]
                  %1394 = vst [vmem:[%s1336 + $0xe0] sm:$0xff] %v1393
                  %v1395 = vld [vmem:[%s1335 + $0xe8] sm:$0xff]
                  %1396 = vst [vmem:[%s1336 + $0xe8] sm:$0xff] %v1395
                  %v1397 = vld [vmem:[%s1335 + $0xf0] sm:$0xff]
                  %1398 = vst [vmem:[%s1336 + $0xf0] sm:$0xff] %v1397
                  %v1399 = vld [vmem:[%s1335 + $0xf8] sm:$0xff]
                  %1400 = vst [vmem:[%s1336 + $0xf8] sm:$0xff] %v1399
                  %v1401 = vld [vmem:[%s1335 + $0x100] sm:$0xff]
                  %1402 = vst [vmem:[%s1336 + $0x100] sm:$0xff] %v1401
                  %v1403 = vld [vmem:[%s1335 + $0x108] sm:$0xff]
                  %1404 = vst [vmem:[%s1336 + $0x108] sm:$0xff] %v1403
                  %v1405 = vld [vmem:[%s1335 + $0x110] sm:$0xff]
                  %1406 = vst [vmem:[%s1336 + $0x110] sm:$0xff] %v1405
                  %v1407 = vld [vmem:[%s1335 + $0x118] sm:$0xff]
                  %1408 = vst [vmem:[%s1336 + $0x118] sm:$0xff] %v1407
                  %v1409 = vld [vmem:[%s1335 + $0x120] sm:$0xff]
                  %1410 = vst [vmem:[%s1336 + $0x120] sm:$0xff] %v1409
                  %v1411 = vld [vmem:[%s1335 + $0x128] sm:$0xff]
                  %1412 = vst [vmem:[%s1336 + $0x128] sm:$0xff] %v1411
                  %v1413 = vld [vmem:[%s1335 + $0x130] sm:$0xff]
                  %1414 = vst [vmem:[%s1336 + $0x130] sm:$0xff] %v1413
                  %v1415 = vld [vmem:[%s1335 + $0x138] sm:$0xff]
                  %1416 = vst [vmem:[%s1336 + $0x138] sm:$0xff] %v1415
                  %v1417 = vld [vmem:[%s1335 + $0x140] sm:$0xff]
                  %1418 = vst [vmem:[%s1336 + $0x140] sm:$0xff] %v1417
                  %v1419 = vld [vmem:[%s1335 + $0x148] sm:$0xff]
                  %1420 = vst [vmem:[%s1336 + $0x148] sm:$0xff] %v1419
                  %v1421 = vld [vmem:[%s1335 + $0x150] sm:$0xff]
                  %1422 = vst [vmem:[%s1336 + $0x150] sm:$0xff] %v1421
                  %v1423 = vld [vmem:[%s1335 + $0x158] sm:$0xff]
                  %1424 = vst [vmem:[%s1336 + $0x158] sm:$0xff] %v1423
                  %v1425 = vld [vmem:[%s1335 + $0x160] sm:$0xff]
                  %1426 = vst [vmem:[%s1336 + $0x160] sm:$0xff] %v1425
                  %v1427 = vld [vmem:[%s1335 + $0x168] sm:$0xff]
                  %1428 = vst [vmem:[%s1336 + $0x168] sm:$0xff] %v1427
                  %v1429 = vld [vmem:[%s1335 + $0x170] sm:$0xff]
                  %1430 = vst [vmem:[%s1336 + $0x170] sm:$0xff] %v1429
                  %v1431 = vld [vmem:[%s1335 + $0x178] sm:$0xff]
                  %1432 = vst [vmem:[%s1336 + $0x178] sm:$0xff] %v1431
                  %v1433 = vld [vmem:[%s1335 + $0x180] sm:$0xff]
                  %1434 = vst [vmem:[%s1336 + $0x180] sm:$0xff] %v1433
                  %v1435 = vld [vmem:[%s1335 + $0x188] sm:$0xff]
                  %1436 = vst [vmem:[%s1336 + $0x188] sm:$0xff] %v1435
                  %v1437 = vld [vmem:[%s1335 + $0x190] sm:$0xff]
                  %1438 = vst [vmem:[%s1336 + $0x190] sm:$0xff] %v1437
                  %v1439 = vld [vmem:[%s1335 + $0x198] sm:$0xff]
                  %1440 = vst [vmem:[%s1336 + $0x198] sm:$0xff] %v1439
                  %v1441 = vld [vmem:[%s1335 + $0x1a0] sm:$0xff]
                  %1442 = vst [vmem:[%s1336 + $0x1a0] sm:$0xff] %v1441
                  %v1443 = vld [vmem:[%s1335 + $0x1a8] sm:$0xff]
                  %1444 = vst [vmem:[%s1336 + $0x1a8] sm:$0xff] %v1443
                  %v1445 = vld [vmem:[%s1335 + $0x1b0] sm:$0xff]
                  %1446 = vst [vmem:[%s1336 + $0x1b0] sm:$0xff] %v1445
                  %v1447 = vld [vmem:[%s1335 + $0x1b8] sm:$0xff]
                  %1448 = vst [vmem:[%s1336 + $0x1b8] sm:$0xff] %v1447
                  %v1449 = vld [vmem:[%s1335 + $0x1c0] sm:$0xff]
                  %1450 = vst [vmem:[%s1336 + $0x1c0] sm:$0xff] %v1449
                  %v1451 = vld [vmem:[%s1335 + $0x1c8] sm:$0xff]
                  %1452 = vst [vmem:[%s1336 + $0x1c8] sm:$0xff] %v1451
                  %v1453 = vld [vmem:[%s1335 + $0x1d0] sm:$0xff]
                  %1454 = vst [vmem:[%s1336 + $0x1d0] sm:$0xff] %v1453
                  %v1455 = vld [vmem:[%s1335 + $0x1d8] sm:$0xff]
                  %1456 = vst [vmem:[%s1336 + $0x1d8] sm:$0xff] %v1455
                  %v1457 = vld [vmem:[%s1335 + $0x1e0] sm:$0xff]
                  %1458 = vst [vmem:[%s1336 + $0x1e0] sm:$0xff] %v1457
                  %v1459 = vld [vmem:[%s1335 + $0x1e8] sm:$0xff]
                  %1460 = vst [vmem:[%s1336 + $0x1e8] sm:$0xff] %v1459
                  %v1461 = vld [vmem:[%s1335 + $0x1f0] sm:$0xff]
                  %1462 = vst [vmem:[%s1336 + $0x1f0] sm:$0xff] %v1461
                  %v1463 = vld [vmem:[%s1335 + $0x1f8] sm:$0xff]
                  %1464 = vst [vmem:[%s1336 + $0x1f8] sm:$0xff] %v1463
                  %s1465 = sadd.s32 1, %s1334
                  %p1466 = scmp.ge.s32.totalorder %s1465, %s1327
                  %s1467 = scalar_select %p1466, 0, %s1465
                  %s1468 = smul.u32 %s1467, 512
                  %s1469 = smul.u32 %s1467, 512
                  %s1470 = scalar_lea.vmem %s1135, %s1468 [#allocation2]
                  %s1471 = scalar_lea.vmem %s1146, %s1469
                $region87: #{tpu_custom_call.1} parent=81 // loop_footer
                  %s1331 = sadd.s32 %s1329, 1
                $region88: #{tpu_custom_call.1} parent=81 // loop_footer_branch
                  %1328 = sbr.rel target = $region84
                $region89: #{tpu_custom_call.1} parent=81 // loop_exit
                  _
                %s1472 = sshrl.u32 %s1142, 6
                %s1473 = sand.u32 %s1142, 63
                %s1474 = smul.u32 %s1472, 64
                %s1475 = smul.u32 8, %s1474
                %s1476 = scalar_lea.vmem %s1135, %s1475 [#allocation2]
                %s1477 = smul.u32 8, %s1474
                %s1478 = scalar_lea.vmem %s1146, %s1477
                // While loop
                $region90: #{tpu_custom_call.1} parent=81 // loop_pre_header
                  _
                $region91: #{tpu_custom_call.1} parent=81 // loop_header
                  %s1480 = sphi 0, %s1482
                  %p1481 = scmp.ge.s32.totalorder %s1480, %s1473
                  %s1485 = sphi 0, %s1492
                  %s1486 = sphi %s1476, %s1495
                  %s1487 = sphi %s1478, %s1496
                $region92: #{tpu_custom_call.1} parent=81 // loop_header_branch
                  %1484 = sbr.rel (%p1481) target = $region96
                $region93: #{tpu_custom_call.1} parent=81 // loop_body
                  %v1488 = vld [vmem:[%s1486] sm:$0xff]
                  %1489 = vst [vmem:[%s1487] sm:$0xff] %v1488
                  %s1490 = sadd.s32 1, %s1485
                  %p1491 = scmp.ge.s32.totalorder %s1490, %s1473
                  %s1492 = scalar_select %p1491, 0, %s1490
                  %s1493 = smul.u32 %s1492, 8
                  %s1494 = smul.u32 %s1492, 8
                  %s1495 = scalar_lea.vmem %s1476, %s1493 [#allocation2]
                  %s1496 = scalar_lea.vmem %s1478, %s1494
                $region94: #{tpu_custom_call.1} parent=81 // loop_footer
                  %s1482 = sadd.s32 %s1480, 1
                $region95: #{tpu_custom_call.1} parent=81 // loop_footer_branch
                  %1479 = sbr.rel target = $region91
                $region96: #{tpu_custom_call.1} parent=81 // loop_exit
                  _
              $region82: #{tpu_custom_call.1} parent=59 // pred_fallthru
                _
              // Predicated region
              $region97: #{tpu_custom_call.1} parent=59 // pred_check
                _
              $region98: #{tpu_custom_call.1} parent=59 // pred_check_branch
                %1498 = sbr.rel target = $region100
              $region99: #{tpu_custom_call.1} parent=59 // pred_region
                _
              $region100: #{tpu_custom_call.1} parent=59 // pred_fallthru
                _
            $region60: #{tpu_custom_call.1} parent=55 // pred_fallthru
              _
            // Predicated region
            $region61: #{tpu_custom_call.1} parent=55 // pred_check
              _
            $region62: #{tpu_custom_call.1} parent=55 // pred_check_branch
              %1153 = sbr.rel target = $region64
            $region63: #{tpu_custom_call.1} parent=55 // pred_region
              %s1155 = sshrl.u32 %s1142, 6
              // While loop
              $region65: #{tpu_custom_call.1} parent=63 // loop_pre_header
                _
              $region66: #{tpu_custom_call.1} parent=63 // loop_header
                %s1157 = sphi 0, %s1159
                %p1158 = scmp.ge.s32.totalorder %s1157, %s1155
                %s1162 = sphi 0, %s1295
                %s1163 = sphi %s1135, %s1298
                %s1164 = sphi %s1146, %s1299
              $region67: #{tpu_custom_call.1} parent=63 // loop_header_branch
                %1161 = sbr.rel (%p1158) target = $region71
              $region68: #{tpu_custom_call.1} parent=63 // loop_body
                %v1165 = vld [vmem:[%s1163] sm:$0xff]
                %1166 = vst [vmem:[%s1164] sm:$0xff] %v1165
                %v1167 = vld [vmem:[%s1163 + $0x8] sm:$0xff]
                %1168 = vst [vmem:[%s1164 + $0x8] sm:$0xff] %v1167
                %v1169 = vld [vmem:[%s1163 + $0x10] sm:$0xff]
                %1170 = vst [vmem:[%s1164 + $0x10] sm:$0xff] %v1169
                %v1171 = vld [vmem:[%s1163 + $0x18] sm:$0xff]
                %1172 = vst [vmem:[%s1164 + $0x18] sm:$0xff] %v1171
                %v1173 = vld [vmem:[%s1163 + $0x20] sm:$0xff]
                %1174 = vst [vmem:[%s1164 + $0x20] sm:$0xff] %v1173
                %v1175 = vld [vmem:[%s1163 + $0x28] sm:$0xff]
                %1176 = vst [vmem:[%s1164 + $0x28] sm:$0xff] %v1175
                %v1177 = vld [vmem:[%s1163 + $0x30] sm:$0xff]
                %1178 = vst [vmem:[%s1164 + $0x30] sm:$0xff] %v1177
                %v1179 = vld [vmem:[%s1163 + $0x38] sm:$0xff]
                %1180 = vst [vmem:[%s1164 + $0x38] sm:$0xff] %v1179
                %v1181 = vld [vmem:[%s1163 + $0x40] sm:$0xff]
                %1182 = vst [vmem:[%s1164 + $0x40] sm:$0xff] %v1181
                %v1183 = vld [vmem:[%s1163 + $0x48] sm:$0xff]
                %1184 = vst [vmem:[%s1164 + $0x48] sm:$0xff] %v1183
                %v1185 = vld [vmem:[%s1163 + $0x50] sm:$0xff]
                %1186 = vst [vmem:[%s1164 + $0x50] sm:$0xff] %v1185
                %v1187 = vld [vmem:[%s1163 + $0x58] sm:$0xff]
                %1188 = vst [vmem:[%s1164 + $0x58] sm:$0xff] %v1187
                %v1189 = vld [vmem:[%s1163 + $0x60] sm:$0xff]
                %1190 = vst [vmem:[%s1164 + $0x60] sm:$0xff] %v1189
                %v1191 = vld [vmem:[%s1163 + $0x68] sm:$0xff]
                %1192 = vst [vmem:[%s1164 + $0x68] sm:$0xff] %v1191
                %v1193 = vld [vmem:[%s1163 + $0x70] sm:$0xff]
                %1194 = vst [vmem:[%s1164 + $0x70] sm:$0xff] %v1193
                %v1195 = vld [vmem:[%s1163 + $0x78] sm:$0xff]
                %1196 = vst [vmem:[%s1164 + $0x78] sm:$0xff] %v1195
                %v1197 = vld [vmem:[%s1163 + $0x80] sm:$0xff]
                %1198 = vst [vmem:[%s1164 + $0x80] sm:$0xff] %v1197
                %v1199 = vld [vmem:[%s1163 + $0x88] sm:$0xff]
                %1200 = vst [vmem:[%s1164 + $0x88] sm:$0xff] %v1199
                %v1201 = vld [vmem:[%s1163 + $0x90] sm:$0xff]
                %1202 = vst [vmem:[%s1164 + $0x90] sm:$0xff] %v1201
                %v1203 = vld [vmem:[%s1163 + $0x98] sm:$0xff]
                %1204 = vst [vmem:[%s1164 + $0x98] sm:$0xff] %v1203
                %v1205 = vld [vmem:[%s1163 + $0xa0] sm:$0xff]
                %1206 = vst [vmem:[%s1164 + $0xa0] sm:$0xff] %v1205
                %v1207 = vld [vmem:[%s1163 + $0xa8] sm:$0xff]
                %1208 = vst [vmem:[%s1164 + $0xa8] sm:$0xff] %v1207
                %v1209 = vld [vmem:[%s1163 + $0xb0] sm:$0xff]
                %1210 = vst [vmem:[%s1164 + $0xb0] sm:$0xff] %v1209
                %v1211 = vld [vmem:[%s1163 + $0xb8] sm:$0xff]
                %1212 = vst [vmem:[%s1164 + $0xb8] sm:$0xff] %v1211
                %v1213 = vld [vmem:[%s1163 + $0xc0] sm:$0xff]
                %1214 = vst [vmem:[%s1164 + $0xc0] sm:$0xff] %v1213
                %v1215 = vld [vmem:[%s1163 + $0xc8] sm:$0xff]
                %1216 = vst [vmem:[%s1164 + $0xc8] sm:$0xff] %v1215
                %v1217 = vld [vmem:[%s1163 + $0xd0] sm:$0xff]
                %1218 = vst [vmem:[%s1164 + $0xd0] sm:$0xff] %v1217
                %v1219 = vld [vmem:[%s1163 + $0xd8] sm:$0xff]
                %1220 = vst [vmem:[%s1164 + $0xd8] sm:$0xff] %v1219
                %v1221 = vld [vmem:[%s1163 + $0xe0] sm:$0xff]
                %1222 = vst [vmem:[%s1164 + $0xe0] sm:$0xff] %v1221
                %v1223 = vld [vmem:[%s1163 + $0xe8] sm:$0xff]
                %1224 = vst [vmem:[%s1164 + $0xe8] sm:$0xff] %v1223
                %v1225 = vld [vmem:[%s1163 + $0xf0] sm:$0xff]
                %1226 = vst [vmem:[%s1164 + $0xf0] sm:$0xff] %v1225
                %v1227 = vld [vmem:[%s1163 + $0xf8] sm:$0xff]
                %1228 = vst [vmem:[%s1164 + $0xf8] sm:$0xff] %v1227
                %v1229 = vld [vmem:[%s1163 + $0x100] sm:$0xff]
                %1230 = vst [vmem:[%s1164 + $0x100] sm:$0xff] %v1229
                %v1231 = vld [vmem:[%s1163 + $0x108] sm:$0xff]
                %1232 = vst [vmem:[%s1164 + $0x108] sm:$0xff] %v1231
                %v1233 = vld [vmem:[%s1163 + $0x110] sm:$0xff]
                %1234 = vst [vmem:[%s1164 + $0x110] sm:$0xff] %v1233
                %v1235 = vld [vmem:[%s1163 + $0x118] sm:$0xff]
                %1236 = vst [vmem:[%s1164 + $0x118] sm:$0xff] %v1235
                %v1237 = vld [vmem:[%s1163 + $0x120] sm:$0xff]
                %1238 = vst [vmem:[%s1164 + $0x120] sm:$0xff] %v1237
                %v1239 = vld [vmem:[%s1163 + $0x128] sm:$0xff]
                %1240 = vst [vmem:[%s1164 + $0x128] sm:$0xff] %v1239
                %v1241 = vld [vmem:[%s1163 + $0x130] sm:$0xff]
                %1242 = vst [vmem:[%s1164 + $0x130] sm:$0xff] %v1241
                %v1243 = vld [vmem:[%s1163 + $0x138] sm:$0xff]
                %1244 = vst [vmem:[%s1164 + $0x138] sm:$0xff] %v1243
                %v1245 = vld [vmem:[%s1163 + $0x140] sm:$0xff]
                %1246 = vst [vmem:[%s1164 + $0x140] sm:$0xff] %v1245
                %v1247 = vld [vmem:[%s1163 + $0x148] sm:$0xff]
                %1248 = vst [vmem:[%s1164 + $0x148] sm:$0xff] %v1247
                %v1249 = vld [vmem:[%s1163 + $0x150] sm:$0xff]
                %1250 = vst [vmem:[%s1164 + $0x150] sm:$0xff] %v1249
                %v1251 = vld [vmem:[%s1163 + $0x158] sm:$0xff]
                %1252 = vst [vmem:[%s1164 + $0x158] sm:$0xff] %v1251
                %v1253 = vld [vmem:[%s1163 + $0x160] sm:$0xff]
                %1254 = vst [vmem:[%s1164 + $0x160] sm:$0xff] %v1253
                %v1255 = vld [vmem:[%s1163 + $0x168] sm:$0xff]
                %1256 = vst [vmem:[%s1164 + $0x168] sm:$0xff] %v1255
                %v1257 = vld [vmem:[%s1163 + $0x170] sm:$0xff]
                %1258 = vst [vmem:[%s1164 + $0x170] sm:$0xff] %v1257
                %v1259 = vld [vmem:[%s1163 + $0x178] sm:$0xff]
                %1260 = vst [vmem:[%s1164 + $0x178] sm:$0xff] %v1259
                %v1261 = vld [vmem:[%s1163 + $0x180] sm:$0xff]
                %1262 = vst [vmem:[%s1164 + $0x180] sm:$0xff] %v1261
                %v1263 = vld [vmem:[%s1163 + $0x188] sm:$0xff]
                %1264 = vst [vmem:[%s1164 + $0x188] sm:$0xff] %v1263
                %v1265 = vld [vmem:[%s1163 + $0x190] sm:$0xff]
                %1266 = vst [vmem:[%s1164 + $0x190] sm:$0xff] %v1265
                %v1267 = vld [vmem:[%s1163 + $0x198] sm:$0xff]
                %1268 = vst [vmem:[%s1164 + $0x198] sm:$0xff] %v1267
                %v1269 = vld [vmem:[%s1163 + $0x1a0] sm:$0xff]
                %1270 = vst [vmem:[%s1164 + $0x1a0] sm:$0xff] %v1269
                %v1271 = vld [vmem:[%s1163 + $0x1a8] sm:$0xff]
                %1272 = vst [vmem:[%s1164 + $0x1a8] sm:$0xff] %v1271
                %v1273 = vld [vmem:[%s1163 + $0x1b0] sm:$0xff]
                %1274 = vst [vmem:[%s1164 + $0x1b0] sm:$0xff] %v1273
                %v1275 = vld [vmem:[%s1163 + $0x1b8] sm:$0xff]
                %1276 = vst [vmem:[%s1164 + $0x1b8] sm:$0xff] %v1275
                %v1277 = vld [vmem:[%s1163 + $0x1c0] sm:$0xff]
                %1278 = vst [vmem:[%s1164 + $0x1c0] sm:$0xff] %v1277
                %v1279 = vld [vmem:[%s1163 + $0x1c8] sm:$0xff]
                %1280 = vst [vmem:[%s1164 + $0x1c8] sm:$0xff] %v1279
                %v1281 = vld [vmem:[%s1163 + $0x1d0] sm:$0xff]
                %1282 = vst [vmem:[%s1164 + $0x1d0] sm:$0xff] %v1281
                %v1283 = vld [vmem:[%s1163 + $0x1d8] sm:$0xff]
                %1284 = vst [vmem:[%s1164 + $0x1d8] sm:$0xff] %v1283
                %v1285 = vld [vmem:[%s1163 + $0x1e0] sm:$0xff]
                %1286 = vst [vmem:[%s1164 + $0x1e0] sm:$0xff] %v1285
                %v1287 = vld [vmem:[%s1163 + $0x1e8] sm:$0xff]
                %1288 = vst [vmem:[%s1164 + $0x1e8] sm:$0xff] %v1287
                %v1289 = vld [vmem:[%s1163 + $0x1f0] sm:$0xff]
                %1290 = vst [vmem:[%s1164 + $0x1f0] sm:$0xff] %v1289
                %v1291 = vld [vmem:[%s1163 + $0x1f8] sm:$0xff]
                %1292 = vst [vmem:[%s1164 + $0x1f8] sm:$0xff] %v1291
                %s1293 = sadd.s32 1, %s1162
                %p1294 = scmp.ge.s32.totalorder %s1293, %s1155
                %s1295 = scalar_select %p1294, 0, %s1293
                %s1296 = smul.u32 %s1295, 512
                %s1297 = smul.u32 %s1295, 512
                %s1298 = scalar_lea.vmem %s1135, %s1296 [#allocation2]
                %s1299 = scalar_lea.vmem %s1146, %s1297
              $region69: #{tpu_custom_call.1} parent=63 // loop_footer
                %s1159 = sadd.s32 %s1157, 1
              $region70: #{tpu_custom_call.1} parent=63 // loop_footer_branch
                %1156 = sbr.rel target = $region66
              $region71: #{tpu_custom_call.1} parent=63 // loop_exit
                _
              %s1300 = sshrl.u32 %s1142, 6
              %s1301 = sand.u32 %s1142, 63
              %s1302 = smul.u32 %s1300, 64
              %s1303 = smul.u32 8, %s1302
              %s1304 = scalar_lea.vmem %s1135, %s1303 [#allocation2]
              %s1305 = smul.u32 8, %s1302
              %s1306 = scalar_lea.vmem %s1146, %s1305
              // While loop
              $region72: #{tpu_custom_call.1} parent=63 // loop_pre_header
                _
              $region73: #{tpu_custom_call.1} parent=63 // loop_header
                %s1308 = sphi 0, %s1310
                %p1309 = scmp.ge.s32.totalorder %s1308, %s1301
                %s1313 = sphi 0, %s1320
                %s1314 = sphi %s1304, %s1323
                %s1315 = sphi %s1306, %s1324
              $region74: #{tpu_custom_call.1} parent=63 // loop_header_branch
                %1312 = sbr.rel (%p1309) target = $region78
              $region75: #{tpu_custom_call.1} parent=63 // loop_body
                %v1316 = vld [vmem:[%s1314] sm:$0xff]
                %1317 = vst [vmem:[%s1315] sm:$0xff] %v1316
                %s1318 = sadd.s32 1, %s1313
                %p1319 = scmp.ge.s32.totalorder %s1318, %s1301
                %s1320 = scalar_select %p1319, 0, %s1318
                %s1321 = smul.u32 %s1320, 8
                %s1322 = smul.u32 %s1320, 8
                %s1323 = scalar_lea.vmem %s1304, %s1321 [#allocation2]
                %s1324 = scalar_lea.vmem %s1306, %s1322
              $region76: #{tpu_custom_call.1} parent=63 // loop_footer
                %s1310 = sadd.s32 %s1308, 1
              $region77: #{tpu_custom_call.1} parent=63 // loop_footer_branch
                %1307 = sbr.rel target = $region73
              $region78: #{tpu_custom_call.1} parent=63 // loop_exit
                _
            $region64: #{tpu_custom_call.1} parent=55 // pred_fallthru
              _
          $region56: #{tpu_custom_call.1} parent=51 // pred_fallthru
            _
          %1499 = vnop
        $region52: #{tpu_custom_call.1} parent=47 // pred_fallthru
          _
      $region48: #{tpu_custom_call.1} parent=5 // pred_fallthru
        _
      %p1500 = scmp.le.s32.totalorder 2, %s13
      // Predicated region
      $region101: #{tpu_custom_call.1} parent=5 // pred_check
        %p1501 = pneg %p1500
      $region102: #{tpu_custom_call.1} parent=5 // pred_check_branch
        %1503 = sbr.rel (%p1501) target = $region104
      $region103: #{tpu_custom_call.1} parent=5 // pred_region
        %s1504 = ssub.s32 %s13, 2
        // Predicated region
        $region105: #{tpu_custom_call.1} parent=103 // pred_check
          %p1505 = pneg %p194
        $region106: #{tpu_custom_call.1} parent=103 // pred_check_branch
          %1507 = sbr.rel (%p1505) target = $region108
        $region107: #{tpu_custom_call.1} parent=103 // pred_region
          %s1508 = sand.u32 %s179, 1
          %s1509 = sand.u32 %s179, 1
          %s1510 = smul.addr %s1509, 512
          %s1511 = scalar_lea.vmem [#allocation2], %s1510
        $region108: #{tpu_custom_call.1} parent=103 // pred_fallthru
          _
      $region104: #{tpu_custom_call.1} parent=5 // pred_fallthru
        _
    $region6: #{tpu_custom_call.1} parent=1 // loop_footer
      %s17 = sadd.s32 1, %s13
    $region7: #{tpu_custom_call.1} parent=1 // loop_footer_branch
      %12 = sbr.rel target = $region3
    $region8: #{tpu_custom_call.1} parent=1 // loop_exit
      _

</llo_original>
